<compile_context>
chip_gen: v7x
topology: tpu7x:2x2x1
jax: 0.10.0
libtpu: 0.0.40
codegen_flags: <defaults>
</compile_context>

<pallas_src>
import functools
import math

import jax
import jax.numpy as jnp
from jax.experimental import pallas as pl
from jax.experimental.pallas import tpu as pltpu


# ----------------------------- in-kernel helpers -----------------------------


def _mm(a, w):
    return jnp.dot(a, w, preferred_element_type=jnp.float32)


def _mlp_apply(h, w0_ref, wrest_ref, b_ref, n_layers):
    """Packed MLP: Linear, then (ReLU, Linear) x (n_layers - 1).

    w0_ref:    (d_in0, P)       first layer weight (col zero-padded)
    wrest_ref: (max(n-1,1), P, P) remaining layer weights (zero-padded)
    b_ref:     (n_layers, P)    stacked biases (zero-padded)
    """
    b = b_ref[...]
    h = _mm(h, w0_ref[...]) + b[0:1]
    for k in range(n_layers - 1):
        h = jnp.maximum(h, 0.0)
        h = _mm(h, wrest_ref[k]) + b[k + 1:k + 2]
    return h


# ----------------------------- kernels ---------------------------------------


def _encoder_kernel(n_lat, n_head, n_det, num_latents, has_post, *refs):
    # inputs : ctx_xy2 (B*n_c, Din), mean_ctx (B, B*n_c),
    #          [tgt_xy2 (B*n_t, Din), mean_tgt (B, B*n_t)],
    #          latent MLP (W0, Wrest, b), latent head (W0, Wrest, b),
    #          determ MLP (W0, Wrest, b)
    # outputs: prior_pack (B, P_head) = [mu || sigma || pad],
    #          [post_pack (B, P_head)], r (B, P_det)
    i = 0
    ctx = refs[i][...]; i += 1
    m_ctx = refs[i][...]; i += 1
    if has_post:
        tgt = refs[i][...]; i += 1
        m_tgt = refs[i][...]; i += 1
    lw0, lwr, lb = refs[i], refs[i + 1], refs[i + 2]; i += 3
    hw0, hwr, hb = refs[i], refs[i + 1], refs[i + 2]; i += 3
    dw0, dwr, db = refs[i], refs[i + 1], refs[i + 2]; i += 3
    prior_ref = refs[i]; i += 1
    if has_post:
        post_ref = refs[i]; i += 1
    r_ref = refs[i]

    def latent_path(xy, mean_mat):
        h = _mlp_apply(xy, lw0, lwr, lb, n_lat)            # (B*n, P_lat)
        hm = _mm(mean_mat, h)                              # per-batch mean, (B, P_lat)
        ms = _mlp_apply(hm, hw0, hwr, hb, n_head)          # (B, P_head), [mu || log_sigma]
        col = jax.lax.broadcasted_iota(jnp.int32, ms.shape, 1)
        # Pack mu (cols < L) and sigma = 0.1 + 0.9*sigmoid(log_sigma) in one store.
        return jnp.where(col < num_latents, ms, 0.1 + 0.9 * jax.nn.sigmoid(ms))

    prior_ref[...] = latent_path(ctx, m_ctx)
    if has_post:
        post_ref[...] = latent_path(tgt, m_tgt)

    hd = _mlp_apply(ctx, dw0, dwr, db, n_det)              # (B*n_c, P_det)
    r_ref[...] = _mm(m_ctx, hd)                            # (B, P_det)


def _decoder_kernel(n_dec, out_width, r_ref, z_ref, x_ref, e_ref,
                    w1r_ref, w1z_ref, w1x_ref, wrest_ref, b_ref, o_ref):
    # First layer split: concat([r, z, x]) @ W1 == r@W1_r + z@W1_z + x@W1_x.
    # The r/z part ("base") is per-batch; expand to rows with the one-hot E.
    b = b_ref[...]
    base = _mm(r_ref[...], w1r_ref[...]) + _mm(z_ref[...], w1z_ref[...]) + b[0:1]  # (B, P)
    h = _mm(x_ref[...], w1x_ref[...]) + _mm(e_ref[...], base)                       # (rows, P)
    for k in range(n_dec - 1):
        h = jnp.maximum(h, 0.0)
        h = _mm(h, wrest_ref[k]) + b[k + 1:k + 2]
    o_ref[...] = h[:, :out_width]                          # packed [mu || log_sigma]


# ----------------------------- pallas_call wrappers ---------------------------


def _mean_matrix(batch, n):
    # (B, B*n) block matrix: row b averages rows b*n .. (b+1)*n-1.
    return jnp.repeat(jnp.eye(batch, dtype=jnp.float32), n, axis=1) / float(n)


def _pick_row_tile(rows, cap=2048):
    if rows <= cap:
        return rows
    for t in (2048, 1024, 512, 256, 128, 64, 32, 16, 8):
        if rows % t == 0:
            return t
    return rows  # TODO(synk): pad ragged row counts instead of one full block.


def run_encoders(ctx_xy, tgt_xy, params, dims):
    """Fused latent (prior [+ posterior]) + deterministic encoders, 1 pallas_call."""
    B, n_c, d_in = ctx_xy.shape
    lat, head, det = params["lat_mlp"], params["lat_head"], params["det_mlp"]
    p_head = head["b"].shape[-1]
    p_det = det["b"].shape[-1]
    has_post = tgt_xy is not None

    args = [ctx_xy.reshape(B * n_c, d_in), _mean_matrix(B, n_c)]
    if has_post:
        n_t = tgt_xy.shape[1]
        args += [tgt_xy.reshape(B * n_t, d_in), _mean_matrix(B, n_t)]
    args += [lat["W0"], lat["W_rest"], lat["b"],
             head["W0"], head["W_rest"], head["b"],
             det["W0"], det["W_rest"], det["b"]]

    out_shape = [jax.ShapeDtypeStruct((B, p_head), jnp.float32)]
    if has_post:
        out_shape.append(jax.ShapeDtypeStruct((B, p_head), jnp.float32))
    out_shape.append(jax.ShapeDtypeStruct((B, p_det), jnp.float32))

    kernel = functools.partial(
        _encoder_kernel, dims["n_lat_layers"], dims["n_head_layers"],
        dims["n_det_layers"], dims["num_latents"], has_post)

    # Single invocation (no grid); whole arrays live in VMEM (a few KB total).
    return pl.pallas_call(kernel, out_shape=tuple(out_shape))(*args)


def run_decoder(r, z, target_x, dec, dims):
    B, n_t, d_x = target_x.shape
    d_y = dims["d_y"]
    out_w = 2 * d_y
    n_dec = dims["n_dec_layers"]
    rows = B * n_t

    x2 = target_x.reshape(rows, d_x)
    expand = jnp.repeat(jnp.eye(B, dtype=jnp.float32), n_t, axis=0)   # (rows, B)

    tile = _pick_row_tile(rows)
    grid = (rows // tile,)

    def full(a):
        nd = a.ndim
        return pl.BlockSpec(a.shape, lambda t, _nd=nd: (0,) * _nd)

    in_specs = [full(r), full(z),
                pl.BlockSpec((tile, d_x), lambda t: (t, 0)),
                pl.BlockSpec((tile, B), lambda t: (t, 0)),
                full(dec["W1_r"]), full(dec["W1_z"]), full(dec["W1_x"]),
                full(dec["W_rest"]), full(dec["b"])]

    out = pl.pallas_call(
        functools.partial(_decoder_kernel, n_dec, out_w),
        grid=grid,
        in_specs=in_specs,
        out_specs=pl.BlockSpec((tile, out_w), lambda t: (t, 0)),
        out_shape=jax.ShapeDtypeStruct((rows, out_w), jnp.float32),
        compiler_params=pltpu.CompilerParams(dimension_semantics=("parallel",)),
    )(r, z, x2, expand, dec["W1_r"], dec["W1_z"], dec["W1_x"], dec["W_rest"], dec["b"])
    return out.reshape(B, n_t, out_w)


# ----------------------------- params / packing -------------------------------


def _init_linear(key, d_in, d_out):
    kw, kb = jax.random.split(key)
    bound = 1.0 / math.sqrt(d_in)
    w = jax.random.uniform(kw, (d_in, d_out), jnp.float32, -bound, bound)
    b = jax.random.uniform(kb, (d_out,), jnp.float32, -bound, bound)
    return w, b


def _init_mlp(key, d_in, sizes):
    keys = jax.random.split(key, len(sizes))
    layers, prev = [], d_in
    for size, k in zip(sizes, keys):
        layers.append(_init_linear(k, prev, size))
        prev = size
    return layers


def _pack_mlp(layers, p_width):
    """Pack a list of (w, b) into (W0, stacked W_rest, stacked biases), zero-padded."""
    n = len(layers)
    w0, b0 = layers[0]
    W0 = jnp.zeros((w0.shape[0], p_width), jnp.float32).at[:, :w0.shape[1]].set(w0)
    Wr = jnp.zeros((max(n - 1, 1), p_width, p_width), jnp.float32)
    B = jnp.zeros((n, p_width), jnp.float32).at[0, :b0.shape[0]].set(b0)
    for k in range(1, n):
        w, b = layers[k]
        Wr = Wr.at[k - 1, :w.shape[0], :w.shape[1]].set(w)
        B = B.at[k, :b.shape[0]].set(b)
    return {"W0": W0, "W_rest": Wr, "b": B}


def init_params(key, d_x, d_y, determ_sizes, latent_sizes, num_latents, decoder_sizes):
    k0, k1, k2, k3, k4, k5 = jax.random.split(key, 6)
    d_in = d_x + d_y

    # ----- latent encoder -----
    lat_layers = _init_mlp(k0, d_in, latent_sizes)
    inter = (latent_sizes[-1] + num_latents) // 2
    wp, bp = _init_linear(k1, latent_sizes[-1], inter)
    wm, bm = _init_linear(k2, inter, num_latents)
    ws, bs = _init_linear(k3, inter, num_latents)
    p_lat = max(latent_sizes)
    p_head = max(inter, 2 * num_latents)
    lat_mlp = _pack_mlp(lat_layers, p_lat)
    # Head = penultimate -> ReLU -> [mean || std], input width padded to p_lat.
    wp_pad = jnp.zeros((p_lat, inter), jnp.float32).at[:wp.shape[0], :].set(wp)
    wms = jnp.concatenate([wm, ws], axis=1)
    bms = jnp.concatenate([bm, bs], axis=0)
    lat_head = _pack_mlp([(wp_pad, bp), (wms, bms)], p_head)

    # ----- deterministic encoder -----
    det_layers = _init_mlp(k4, d_in, determ_sizes)
    p_det = max(determ_sizes)
    det_mlp = _pack_mlp(det_layers, p_det)

    # ----- decoder (first layer split into r / z / x contributions) -----
    H = determ_sizes[-1]
    dec_layers = _init_mlp(k5, H + num_latents + d_x, decoder_sizes)
    p_dec = max(decoder_sizes)
    s0 = decoder_sizes[0]
    w1, b1 = dec_layers[0]
    W1_r = jnp.zeros((p_det, p_dec), jnp.float32).at[:H, :s0].set(w1[:H])
    W1_z = jnp.zeros((num_latents, p_dec), jnp.float32).at[:, :s0].set(w1[H:H + num_latents])
    W1_x = jnp.zeros((d_x, p_dec), jnp.float32).at[:, :s0].set(w1[H + num_latents:])
    n_dec = len(decoder_sizes)
    W_rest = jnp.zeros((max(n_dec - 1, 1), p_dec, p_dec), jnp.float32)
    b_dec = jnp.zeros((n_dec, p_dec), jnp.float32).at[0, :s0].set(b1)
    for k in range(1, n_dec):
        w, b = dec_layers[k]
        W_rest = W_rest.at[k - 1, :w.shape[0], :w.shape[1]].set(w)
        b_dec = b_dec.at[k, :b.shape[0]].set(b)
    decoder = {"W1_r": W1_r, "W1_z": W1_z, "W1_x": W1_x, "W_rest": W_rest, "b": b_dec}

    params = {"lat_mlp": lat_mlp, "lat_head": lat_head,
              "det_mlp": det_mlp, "decoder": decoder}
    dims = {"num_latents": num_latents, "d_y": d_y,
            "n_lat_layers": len(latent_sizes), "n_head_layers": 2,
            "n_det_layers": len(determ_sizes), "n_dec_layers": n_dec}
    return params, dims


# ----------------------------- model glue -------------------------------------


def latent_neural_process(params, dims, context_x, context_y, target_x,
                          target_y=None, *, rng):
    """Returns (mu, sigma, log_p, kl_div, loss) like the torch module's forward."""
    B, n_t, _ = target_x.shape
    d_y = context_y.shape[-1]
    L = dims["num_latents"]

    ctx_xy = jnp.concatenate([context_x, context_y], axis=-1)

    if target_y is not None:
        tgt_xy = jnp.concatenate([target_x, target_y], axis=-1)
        prior_pack, post_pack, r = run_encoders(ctx_xy, tgt_xy, params, dims)
        post_mu, post_sigma = post_pack[:, :L], post_pack[:, L:2 * L]
    else:
        prior_pack, r = run_encoders(ctx_xy, None, params, dims)
        post_mu = post_sigma = None
    prior_mu, prior_sigma = prior_pack[:, :L], prior_pack[:, L:2 * L]

    # Sampling via the reparameterization trick (torch .sample() has no
    # JAX-equivalent RNG stream; same distribution).
    if target_y is not None:
        z = post_mu + post_sigma * jax.random.normal(rng, post_mu.shape)
    else:
        z = prior_mu + prior_sigma * jax.random.normal(rng, prior_mu.shape)

    dec_out = run_decoder(r, z, target_x, params["decoder"], dims)  # (B, n_t, 2*d_y)
    mu = dec_out[..., :d_y]
    log_sigma = dec_out[..., d_y:]
    sigma = 0.1 + 0.9 * jax.nn.softplus(log_sigma)

    if target_y is not None:
        # MultivariateNormal(diag(sigma)).log_prob(target_y), shape (B, n_t)
        log_p = (-0.5 * jnp.sum(((target_y - mu) / sigma) ** 2, axis=-1)
                 - jnp.sum(jnp.log(sigma), axis=-1)
                 - 0.5 * d_y * jnp.log(2.0 * jnp.pi))
        # KL(posterior || prior) for diagonal Normals, summed over latents, (B, 1)
        kl = (jnp.log(prior_sigma) - jnp.log(post_sigma)
              + (post_sigma ** 2 + (post_mu - prior_mu) ** 2) / (2.0 * prior_sigma ** 2)
              - 0.5)
        kl_div = jnp.sum(kl, axis=-1, keepdims=True)
        loss = -jnp.mean(log_p - kl_div / n_t)
    else:
        log_p = kl_div = loss = None

    # TODO(synk): torch.distributions objects (MultivariateNormal / Normal) are not
    # returned; mu/sigma plus analytic log_prob / KL reproduce their use here.
    return mu, sigma, log_p, kl_div, loss


# ----------------------------- main --------------------------------------------


if __name__ == "__main__":
    key = jax.random.PRNGKey(0)
    kp, kx, ky, ktx, kty, ks = jax.random.split(key, 6)

    B, n_c, n_t = 2, 8, 8
    d_x, d_y = 2, 1
    determ_sizes = [32, 32]
    latent_sizes = [32, 32]
    num_latents = 16
    decoder_sizes = [32, 2 * d_y]

    params, dims = init_params(kp, d_x, d_y, determ_sizes, latent_sizes,
                               num_latents, decoder_sizes)

    context_x = jax.random.normal(kx, (B, n_c, d_x), jnp.float32)
    context_y = jax.random.normal(ky, (B, n_c, d_y), jnp.float32)
    target_x = jax.random.normal(ktx, (B, n_t, d_x), jnp.float32)
    target_y = jax.random.normal(kty, (B, n_t, d_y), jnp.float32)

    mu, sigma, log_p, kl_div, loss = latent_neural_process(
        params, dims, context_x, context_y, target_x, target_y, rng=ks)
    jax.block_until_ready((mu, sigma, log_p, kl_div, loss))

    assert mu.shape == (B, n_t, d_y)
    assert sigma.shape == (B, n_t, d_y)
    assert log_p.shape == (B, n_t)
    assert kl_div.shape == (B, 1)
    assert bool(jnp.isfinite(loss))
    assert bool(jnp.all(sigma > 0.0))

    # Inference path (target_y=None) as in the torch module.
    mu2, sigma2, lp2, kd2, loss2 = latent_neural_process(
        params, dims, context_x, context_y, target_x, None, rng=ks)
    jax.block_until_ready((mu2, sigma2))
    assert mu2.shape == (B, n_t, d_y) and sigma2.shape == (B, n_t, d_y)
    assert lp2 is None and kd2 is None and loss2 is None

    print("KERNEL_OK")
</pallas_src>

<mosaic_0001>
module attributes {stable_mosaic.version = 11 : i64} {
  func.func @_encoder_kernel(%arg0: memref<16x3xf32, #tpu.memory_space<vmem>>, %arg1: memref<2x16xf32, #tpu.memory_space<vmem>>, %arg2: memref<16x3xf32, #tpu.memory_space<vmem>>, %arg3: memref<2x16xf32, #tpu.memory_space<vmem>>, %arg4: memref<3x32xf32, #tpu.memory_space<vmem>>, %arg5: memref<1x32x32xf32, #tpu.memory_space<vmem>>, %arg6: memref<2x32xf32, #tpu.memory_space<vmem>>, %arg7: memref<32x32xf32, #tpu.memory_space<vmem>>, %arg8: memref<1x32x32xf32, #tpu.memory_space<vmem>>, %arg9: memref<2x32xf32, #tpu.memory_space<vmem>>, %arg10: memref<3x32xf32, #tpu.memory_space<vmem>>, %arg11: memref<1x32x32xf32, #tpu.memory_space<vmem>>, %arg12: memref<2x32xf32, #tpu.memory_space<vmem>>, %arg13: memref<2x32xf32, #tpu.memory_space<vmem>>, %arg14: memref<2x32xf32, #tpu.memory_space<vmem>>, %arg15: memref<2x32xf32, #tpu.memory_space<vmem>>) attributes {dimension_semantics = [], scalar_prefetch = 0 : i64, scratch_operands = 0 : i64, tpu.core_type = #tpu.core_type<tc>} {
    %c0 = arith.constant 0 : index
    %c0_0 = arith.constant 0 : index
    %0 = vector.load %arg0[%c0, %c0_0] : memref<16x3xf32, #tpu.memory_space<vmem>>, vector<16x3xf32>
    %c0_1 = arith.constant 0 : index
    %c0_2 = arith.constant 0 : index
    %1 = vector.load %arg1[%c0_1, %c0_2] : memref<2x16xf32, #tpu.memory_space<vmem>>, vector<2x16xf32>
    %c0_3 = arith.constant 0 : index
    %c0_4 = arith.constant 0 : index
    %2 = vector.load %arg2[%c0_3, %c0_4] : memref<16x3xf32, #tpu.memory_space<vmem>>, vector<16x3xf32>
    %c0_5 = arith.constant 0 : index
    %c0_6 = arith.constant 0 : index
    %3 = vector.load %arg3[%c0_5, %c0_6] : memref<2x16xf32, #tpu.memory_space<vmem>>, vector<2x16xf32>
    %c0_7 = arith.constant 0 : index
    %c0_8 = arith.constant 0 : index
    %4 = vector.load %arg6[%c0_7, %c0_8] : memref<2x32xf32, #tpu.memory_space<vmem>>, vector<2x32xf32>
    %c0_9 = arith.constant 0 : index
    %c0_10 = arith.constant 0 : index
    %5 = vector.load %arg4[%c0_9, %c0_10] : memref<3x32xf32, #tpu.memory_space<vmem>>, vector<3x32xf32>
    %cst = arith.constant dense<0.000000e+00> : vector<16x32xf32>
    %6 = tpu.matmul %0, %5, %cst {dimension_numbers = #tpu.dot_dimension_numbers<[1], [0], [0], [1], [0, 0, 1, 1], [], []>} : vector<16x3xf32>, vector<3x32xf32>, vector<16x32xf32> -> vector<16x32xf32>
    %7 = vector.extract_strided_slice %4 {offsets = [0, 0], sizes = [1, 32], strides = [1, 1]} : vector<2x32xf32> to vector<1x32xf32>
    %8 = vector.broadcast %7 : vector<1x32xf32> to vector<16x32xf32>
    %9 = arith.addf %6, %8 : vector<16x32xf32>
    %cst_11 = arith.constant 0.000000e+00 : f32
    %10 = vector.broadcast %cst_11 : f32 to vector<16x32xf32>
    %11 = arith.maximumf %9, %10 : vector<16x32xf32>
    %c0_12 = arith.constant 0 : index
    %c0_13 = arith.constant 0 : index
    %c0_14 = arith.constant 0 : index
    %12 = vector.load %arg5[%c0_12, %c0_13, %c0_14] : memref<1x32x32xf32, #tpu.memory_space<vmem>>, vector<1x32x32xf32>
    %13 = vector.shape_cast %12 : vector<1x32x32xf32> to vector<32x32xf32>
    %cst_15 = arith.constant dense<0.000000e+00> : vector<16x32xf32>
    %14 = tpu.matmul %11, %13, %cst_15 {dimension_numbers = #tpu.dot_dimension_numbers<[1], [0], [0], [1], [0, 0, 1, 1], [], []>} : vector<16x32xf32>, vector<32x32xf32>, vector<16x32xf32> -> vector<16x32xf32>
    %15 = vector.extract_strided_slice %4 {offsets = [1, 0], sizes = [1, 32], strides = [1, 1]} : vector<2x32xf32> to vector<1x32xf32>
    %16 = vector.broadcast %15 : vector<1x32xf32> to vector<16x32xf32>
    %17 = arith.addf %14, %16 : vector<16x32xf32>
    %cst_16 = arith.constant dense<0.000000e+00> : vector<2x32xf32>
    %18 = tpu.matmul %1, %17, %cst_16 {dimension_numbers = #tpu.dot_dimension_numbers<[1], [0], [0], [1], [0, 0, 1, 1], [], []>} : vector<2x16xf32>, vector<16x32xf32>, vector<2x32xf32> -> vector<2x32xf32>
    %c0_17 = arith.constant 0 : index
    %c0_18 = arith.constant 0 : index
    %19 = vector.load %arg9[%c0_17, %c0_18] : memref<2x32xf32, #tpu.memory_space<vmem>>, vector<2x32xf32>
    %c0_19 = arith.constant 0 : index
    %c0_20 = arith.constant 0 : index
    %20 = vector.load %arg7[%c0_19, %c0_20] : memref<32x32xf32, #tpu.memory_space<vmem>>, vector<32x32xf32>
    %cst_21 = arith.constant dense<0.000000e+00> : vector<2x32xf32>
    %21 = tpu.matmul %18, %20, %cst_21 {dimension_numbers = #tpu.dot_dimension_numbers<[1], [0], [0], [1], [0, 0, 1, 1], [], []>} : vector<2x32xf32>, vector<32x32xf32>, vector<2x32xf32> -> vector<2x32xf32>
    %22 = vector.extract_strided_slice %19 {offsets = [0, 0], sizes = [1, 32], strides = [1, 1]} : vector<2x32xf32> to vector<1x32xf32>
    %23 = vector.broadcast %22 : vector<1x32xf32> to vector<2x32xf32>
    %24 = arith.addf %21, %23 : vector<2x32xf32>
    %cst_22 = arith.constant 0.000000e+00 : f32
    %25 = vector.broadcast %cst_22 : f32 to vector<2x32xf32>
    %26 = arith.maximumf %24, %25 : vector<2x32xf32>
    %c0_23 = arith.constant 0 : index
    %c0_24 = arith.constant 0 : index
    %c0_25 = arith.constant 0 : index
    %27 = vector.load %arg8[%c0_23, %c0_24, %c0_25] : memref<1x32x32xf32, #tpu.memory_space<vmem>>, vector<1x32x32xf32>
    %28 = vector.shape_cast %27 : vector<1x32x32xf32> to vector<32x32xf32>
    %cst_26 = arith.constant dense<0.000000e+00> : vector<2x32xf32>
    %29 = tpu.matmul %26, %28, %cst_26 {dimension_numbers = #tpu.dot_dimension_numbers<[1], [0], [0], [1], [0, 0, 1, 1], [], []>} : vector<2x32xf32>, vector<32x32xf32>, vector<2x32xf32> -> vector<2x32xf32>
    %30 = vector.extract_strided_slice %19 {offsets = [1, 0], sizes = [1, 32], strides = [1, 1]} : vector<2x32xf32> to vector<1x32xf32>
    %31 = vector.broadcast %30 : vector<1x32xf32> to vector<2x32xf32>
    %32 = arith.addf %29, %31 : vector<2x32xf32>
    %33 = tpu.iota {dimensions = array<i32: 1>} : vector<2x32xi32>
    %c16_i32 = arith.constant 16 : i32
    %34 = vector.broadcast %c16_i32 : i32 to vector<2x32xi32>
    %35 = arith.cmpi slt, %33, %34 : vector<2x32xi32>
    %36 = arith.negf %32 : vector<2x32xf32>
    %37 = math.exp %36 : vector<2x32xf32>
    %cst_27 = arith.constant 1.000000e+00 : f32
    %38 = vector.broadcast %cst_27 : f32 to vector<2x32xf32>
    %39 = arith.addf %38, %37 : vector<2x32xf32>
    %40 = arith.divf %38, %39 : vector<2x32xf32>
    %cst_28 = arith.constant 0.899999976 : f32
    %41 = vector.broadcast %cst_28 : f32 to vector<2x32xf32>
    %42 = arith.mulf %41, %40 : vector<2x32xf32>
    %cst_29 = arith.constant 1.000000e-01 : f32
    %43 = vector.broadcast %cst_29 : f32 to vector<2x32xf32>
    %44 = arith.addf %43, %42 : vector<2x32xf32>
    %45 = arith.select %35, %32, %44 : vector<2x32xi1>, vector<2x32xf32>
    %c0_30 = arith.constant 0 : index
    %c0_31 = arith.constant 0 : index
    %46 = vector.load %arg13[%c0_30, %c0_31] : memref<2x32xf32, #tpu.memory_space<vmem>>, vector<2x32xf32>
    tpu.vector_store %arg13[%c0_30, %c0_31], %45 {strides = array<i32>} : memref<2x32xf32, #tpu.memory_space<vmem>>, vector<2x32xf32>,
    %c0_32 = arith.constant 0 : index
    %c0_33 = arith.constant 0 : index
    %47 = vector.load %arg6[%c0_32, %c0_33] : memref<2x32xf32, #tpu.memory_space<vmem>>, vector<2x32xf32>
    %c0_34 = arith.constant 0 : index
    %c0_35 = arith.constant 0 : index
    %48 = vector.load %arg4[%c0_34, %c0_35] : memref<3x32xf32, #tpu.memory_space<vmem>>, vector<3x32xf32>
    %cst_36 = arith.constant dense<0.000000e+00> : vector<16x32xf32>
    %49 = tpu.matmul %2, %48, %cst_36 {dimension_numbers = #tpu.dot_dimension_numbers<[1], [0], [0], [1], [0, 0, 1, 1], [], []>} : vector<16x3xf32>, vector<3x32xf32>, vector<16x32xf32> -> vector<16x32xf32>
    %50 = vector.extract_strided_slice %47 {offsets = [0, 0], sizes = [1, 32], strides = [1, 1]} : vector<2x32xf32> to vector<1x32xf32>
    %51 = vector.broadcast %50 : vector<1x32xf32> to vector<16x32xf32>
    %52 = arith.addf %49, %51 : vector<16x32xf32>
    %cst_37 = arith.constant 0.000000e+00 : f32
    %53 = vector.broadcast %cst_37 : f32 to vector<16x32xf32>
    %54 = arith.maximumf %52, %53 : vector<16x32xf32>
    %c0_38 = arith.constant 0 : index
    %c0_39 = arith.constant 0 : index
    %c0_40 = arith.constant 0 : index
    %55 = vector.load %arg5[%c0_38, %c0_39, %c0_40] : memref<1x32x32xf32, #tpu.memory_space<vmem>>, vector<1x32x32xf32>
    %56 = vector.shape_cast %55 : vector<1x32x32xf32> to vector<32x32xf32>
    %cst_41 = arith.constant dense<0.000000e+00> : vector<16x32xf32>
    %57 = tpu.matmul %54, %56, %cst_41 {dimension_numbers = #tpu.dot_dimension_numbers<[1], [0], [0], [1], [0, 0, 1, 1], [], []>} : vector<16x32xf32>, vector<32x32xf32>, vector<16x32xf32> -> vector<16x32xf32>
    %58 = vector.extract_strided_slice %47 {offsets = [1, 0], sizes = [1, 32], strides = [1, 1]} : vector<2x32xf32> to vector<1x32xf32>
    %59 = vector.broadcast %58 : vector<1x32xf32> to vector<16x32xf32>
    %60 = arith.addf %57, %59 : vector<16x32xf32>
    %cst_42 = arith.constant dense<0.000000e+00> : vector<2x32xf32>
    %61 = tpu.matmul %3, %60, %cst_42 {dimension_numbers = #tpu.dot_dimension_numbers<[1], [0], [0], [1], [0, 0, 1, 1], [], []>} : vector<2x16xf32>, vector<16x32xf32>, vector<2x32xf32> -> vector<2x32xf32>
    %c0_43 = arith.constant 0 : index
    %c0_44 = arith.constant 0 : index
    %62 = vector.load %arg9[%c0_43, %c0_44] : memref<2x32xf32, #tpu.memory_space<vmem>>, vector<2x32xf32>
    %c0_45 = arith.constant 0 : index
    %c0_46 = arith.constant 0 : index
    %63 = vector.load %arg7[%c0_45, %c0_46] : memref<32x32xf32, #tpu.memory_space<vmem>>, vector<32x32xf32>
    %cst_47 = arith.constant dense<0.000000e+00> : vector<2x32xf32>
    %64 = tpu.matmul %61, %63, %cst_47 {dimension_numbers = #tpu.dot_dimension_numbers<[1], [0], [0], [1], [0, 0, 1, 1], [], []>} : vector<2x32xf32>, vector<32x32xf32>, vector<2x32xf32> -> vector<2x32xf32>
    %65 = vector.extract_strided_slice %62 {offsets = [0, 0], sizes = [1, 32], strides = [1, 1]} : vector<2x32xf32> to vector<1x32xf32>
    %66 = vector.broadcast %65 : vector<1x32xf32> to vector<2x32xf32>
    %67 = arith.addf %64, %66 : vector<2x32xf32>
    %cst_48 = arith.constant 0.000000e+00 : f32
    %68 = vector.broadcast %cst_48 : f32 to vector<2x32xf32>
    %69 = arith.maximumf %67, %68 : vector<2x32xf32>
    %c0_49 = arith.constant 0 : index
    %c0_50 = arith.constant 0 : index
    %c0_51 = arith.constant 0 : index
    %70 = vector.load %arg8[%c0_49, %c0_50, %c0_51] : memref<1x32x32xf32, #tpu.memory_space<vmem>>, vector<1x32x32xf32>
    %71 = vector.shape_cast %70 : vector<1x32x32xf32> to vector<32x32xf32>
    %cst_52 = arith.constant dense<0.000000e+00> : vector<2x32xf32>
    %72 = tpu.matmul %69, %71, %cst_52 {dimension_numbers = #tpu.dot_dimension_numbers<[1], [0], [0], [1], [0, 0, 1, 1], [], []>} : vector<2x32xf32>, vector<32x32xf32>, vector<2x32xf32> -> vector<2x32xf32>
    %73 = vector.extract_strided_slice %62 {offsets = [1, 0], sizes = [1, 32], strides = [1, 1]} : vector<2x32xf32> to vector<1x32xf32>
    %74 = vector.broadcast %73 : vector<1x32xf32> to vector<2x32xf32>
    %75 = arith.addf %72, %74 : vector<2x32xf32>
    %76 = tpu.iota {dimensions = array<i32: 1>} : vector<2x32xi32>
    %c16_i32_53 = arith.constant 16 : i32
    %77 = vector.broadcast %c16_i32_53 : i32 to vector<2x32xi32>
    %78 = arith.cmpi slt, %76, %77 : vector<2x32xi32>
    %79 = arith.negf %75 : vector<2x32xf32>
    %80 = math.exp %79 : vector<2x32xf32>
    %cst_54 = arith.constant 1.000000e+00 : f32
    %81 = vector.broadcast %cst_54 : f32 to vector<2x32xf32>
    %82 = arith.addf %81, %80 : vector<2x32xf32>
    %83 = arith.divf %81, %82 : vector<2x32xf32>
    %cst_55 = arith.constant 0.899999976 : f32
    %84 = vector.broadcast %cst_55 : f32 to vector<2x32xf32>
    %85 = arith.mulf %84, %83 : vector<2x32xf32>
    %cst_56 = arith.constant 1.000000e-01 : f32
    %86 = vector.broadcast %cst_56 : f32 to vector<2x32xf32>
    %87 = arith.addf %86, %85 : vector<2x32xf32>
    %88 = arith.select %78, %75, %87 : vector<2x32xi1>, vector<2x32xf32>
    %c0_57 = arith.constant 0 : index
    %c0_58 = arith.constant 0 : index
    %89 = vector.load %arg14[%c0_57, %c0_58] : memref<2x32xf32, #tpu.memory_space<vmem>>, vector<2x32xf32>
    tpu.vector_store %arg14[%c0_57, %c0_58], %88 {strides = array<i32>} : memref<2x32xf32, #tpu.memory_space<vmem>>, vector<2x32xf32>,
    %c0_59 = arith.constant 0 : index
    %c0_60 = arith.constant 0 : index
    %90 = vector.load %arg12[%c0_59, %c0_60] : memref<2x32xf32, #tpu.memory_space<vmem>>, vector<2x32xf32>
    %c0_61 = arith.constant 0 : index
    %c0_62 = arith.constant 0 : index
    %91 = vector.load %arg10[%c0_61, %c0_62] : memref<3x32xf32, #tpu.memory_space<vmem>>, vector<3x32xf32>
    %cst_63 = arith.constant dense<0.000000e+00> : vector<16x32xf32>
    %92 = tpu.matmul %0, %91, %cst_63 {dimension_numbers = #tpu.dot_dimension_numbers<[1], [0], [0], [1], [0, 0, 1, 1], [], []>} : vector<16x3xf32>, vector<3x32xf32>, vector<16x32xf32> -> vector<16x32xf32>
    %93 = vector.extract_strided_slice %90 {offsets = [0, 0], sizes = [1, 32], strides = [1, 1]} : vector<2x32xf32> to vector<1x32xf32>
    %94 = vector.broadcast %93 : vector<1x32xf32> to vector<16x32xf32>
    %95 = arith.addf %92, %94 : vector<16x32xf32>
    %cst_64 = arith.constant 0.000000e+00 : f32
    %96 = vector.broadcast %cst_64 : f32 to vector<16x32xf32>
    %97 = arith.maximumf %95, %96 : vector<16x32xf32>
    %c0_65 = arith.constant 0 : index
    %c0_66 = arith.constant 0 : index
    %c0_67 = arith.constant 0 : index
    %98 = vector.load %arg11[%c0_65, %c0_66, %c0_67] : memref<1x32x32xf32, #tpu.memory_space<vmem>>, vector<1x32x32xf32>
    %99 = vector.shape_cast %98 : vector<1x32x32xf32> to vector<32x32xf32>
    %cst_68 = arith.constant dense<0.000000e+00> : vector<16x32xf32>
    %100 = tpu.matmul %97, %99, %cst_68 {dimension_numbers = #tpu.dot_dimension_numbers<[1], [0], [0], [1], [0, 0, 1, 1], [], []>} : vector<16x32xf32>, vector<32x32xf32>, vector<16x32xf32> -> vector<16x32xf32>
    %101 = vector.extract_strided_slice %90 {offsets = [1, 0], sizes = [1, 32], strides = [1, 1]} : vector<2x32xf32> to vector<1x32xf32>
    %102 = vector.broadcast %101 : vector<1x32xf32> to vector<16x32xf32>
    %103 = arith.addf %100, %102 : vector<16x32xf32>
    %cst_69 = arith.constant dense<0.000000e+00> : vector<2x32xf32>
    %104 = tpu.matmul %1, %103, %cst_69 {dimension_numbers = #tpu.dot_dimension_numbers<[1], [0], [0], [1], [0, 0, 1, 1], [], []>} : vector<2x16xf32>, vector<16x32xf32>, vector<2x32xf32> -> vector<2x32xf32>
    %c0_70 = arith.constant 0 : index
    %c0_71 = arith.constant 0 : index
    %105 = vector.load %arg15[%c0_70, %c0_71] : memref<2x32xf32, #tpu.memory_space<vmem>>, vector<2x32xf32>
    tpu.vector_store %arg15[%c0_70, %c0_71], %104 {strides = array<i32>} : memref<2x32xf32, #tpu.memory_space<vmem>>, vector<2x32xf32>,
    return
  }
}

</mosaic_0001>

<llo_original>
// kernel: tpu_custom_call.1
$region0: #{tpu_custom_call.1}
  #allocation0 [shape = 'u32[]', space=smem, size = 0x4, offset = 0x4, fixed_abs, tag = 'smem constant byte address 0x4 - core index']
  #allocation1 [shape = 'u32[144,128]{1,0:T(1,128)}', space=vmem, size = 0x12000, scoped, tag = 'internal scratch']
  %s0 = inlined_call_operand.vmem [shape: f32[16,3], index: 0, kind: input, shape index: {}]
  %s1 = inlined_call_operand.vmem [shape: f32[2,16], index: 1, kind: input, shape index: {}]
  %s2 = inlined_call_operand.vmem [shape: f32[16,3], index: 2, kind: input, shape index: {}]
  %s3 = inlined_call_operand.hbm [shape: f32[2,16], index: 3, kind: input, shape index: {}]
  %s4 = inlined_call_operand.hbm [shape: f32[3,32], index: 4, kind: input, shape index: {}]
  %s5 = inlined_call_operand.vmem [shape: f32[1,32,32], index: 5, kind: input, shape index: {}]
  %s6 = inlined_call_operand.hbm [shape: f32[2,32], index: 6, kind: input, shape index: {}]
  %s7 = inlined_call_operand.vmem [shape: f32[32,32], index: 7, kind: input, shape index: {}]
  %s8 = inlined_call_operand.hbm [shape: f32[1,32,32], index: 8, kind: input, shape index: {}]
  %s9 = inlined_call_operand.vmem [shape: f32[2,32], index: 9, kind: input, shape index: {}]
  %s10 = inlined_call_operand.vmem [shape: f32[3,32], index: 10, kind: input, shape index: {}]
  %s11 = inlined_call_operand.hbm [shape: f32[1,32,32], index: 11, kind: input, shape index: {}]
  %s12 = inlined_call_operand.vmem [shape: f32[2,32], index: 12, kind: input, shape index: {}]
  %s13 = inlined_call_operand.hbm [shape: f32[2,32], index: 13, kind: output, shape index: {0}]
  %s14 = inlined_call_operand.hbm [shape: f32[2,32], index: 14, kind: output, shape index: {1}]
  %s15 = inlined_call_operand.hbm [shape: f32[2,32], index: 15, kind: output, shape index: {2}]
  %16 = xla_tuple %s13, %s14, %s15
  %s17 = sld [smem:[#allocation0]]
  $region98: #{tpu_custom_call.1} parent=0
    _
  %s19 = ssub.s32 1, %s17
  %s20 = scalar_select 0, %s19, %s17
  $region1: #{tpu_custom_call.1} parent=0
    #allocation2 [shape = 'u8[1024]{0}', space=vmem, size = 0x400, scoped, tag = 'input window, operand 3, single buffered']
    #allocation3 [shape = 's32[1]{0}', space=sflag, size = 0x4, scoped, tag = 'scoped memory for tpu_custom_call.1']
    #allocation4 [shape = 's32[1]{0}', space=sflag, size = 0x4, scoped, tag = 'scoped memory for tpu_custom_call.1']
    #allocation5 [shape = 'u8[2048]{0}', space=vmem, size = 0x800, scoped, tag = 'input window, operand 4, single buffered']
    #allocation6 [shape = 's32[1]{0}', space=sflag, size = 0x4, scoped, tag = 'scoped memory for tpu_custom_call.1']
    #allocation7 [shape = 'u8[1024]{0}', space=vmem, size = 0x400, scoped, tag = 'input window, operand 6, single buffered']
    #allocation8 [shape = 'u8[16384]{0}', space=vmem, size = 0x4000, scoped, tag = 'input window, operand 8, single buffered']
    #allocation9 [shape = 's32[1]{0}', space=sflag, size = 0x4, scoped, tag = 'scoped memory for tpu_custom_call.1']
    #allocation10 [shape = 'u8[16384]{0}', space=vmem, size = 0x4000, scoped, tag = 'input window, operand 11, single buffered']
    #allocation11 [shape = 'u8[1024]{0}', space=vmem, size = 0x400, scoped, tag = 'output window, operand 0, single buffered']
    #allocation12 [shape = 'u8[1024]{0}', space=vmem, size = 0x400, scoped, tag = 'output window, operand 1, single buffered']
    #allocation13 [shape = 's32[1]{0}', space=sflag, size = 0x4, scoped, tag = 'scoped memory for tpu_custom_call.1']
    #allocation14 [shape = 'u8[1024]{0}', space=vmem, size = 0x400, scoped, tag = 'output window, operand 2, single buffered']
    %21 = vsyncpa [#allocation3], 0
    %22 = vsyncpa [#allocation6], 0
    %23 = vsyncpa [#allocation9], 0
    %24 = vsyncpa [#allocation4], 0
    %25 = vsyncpa [#allocation13], 0
    // Predicated region
    $region2: #{tpu_custom_call.1} parent=1 // pred_check
      _
    $region3: #{tpu_custom_call.1} parent=1 // pred_check_branch
      %27 = sbr.rel (0) target = $region5
    $region4: #{tpu_custom_call.1} parent=1 // pred_region
      _
    $region5: #{tpu_custom_call.1} parent=1 // pred_fallthru
      _
    // Predicated region
    $region6: #{tpu_custom_call.1} parent=1 // pred_check
      _
    $region7: #{tpu_custom_call.1} parent=1 // pred_check_branch
      %29 = sbr.rel (0) target = $region9
    $region8: #{tpu_custom_call.1} parent=1 // pred_region
      _
    $region9: #{tpu_custom_call.1} parent=1 // pred_fallthru
      _
    // Predicated region
    $region10: #{tpu_custom_call.1} parent=1 // pred_check
      _
    $region11: #{tpu_custom_call.1} parent=1 // pred_check_branch
      %31 = sbr.rel (0) target = $region13
    $region12: #{tpu_custom_call.1} parent=1 // pred_region
      _
    $region13: #{tpu_custom_call.1} parent=1 // pred_fallthru
      _
    // Predicated region
    $region14: #{tpu_custom_call.1} parent=1 // pred_check
      _
    $region15: #{tpu_custom_call.1} parent=1 // pred_check_branch
      %33 = sbr.rel (0) target = $region17
    $region16: #{tpu_custom_call.1} parent=1 // pred_region
      %s35 = ssub.s32 32, 32
      %36 = vsyncadd [#allocation3], %s35
      %s38 = sshll.u32 [#allocation2], 4
      %s39 = int_to_ptr.vmem [resolvable:$true] %s38
      %41 = dma.hbm_to_vmem [thread:$0]  %s3, 32, %s39, [#allocation3]
    $region17: #{tpu_custom_call.1} parent=1 // pred_fallthru
      _
    // Predicated region
    $region18: #{tpu_custom_call.1} parent=1 // pred_check
      _
    $region19: #{tpu_custom_call.1} parent=1 // pred_check_branch
      %43 = sbr.rel (0) target = $region21
    $region20: #{tpu_custom_call.1} parent=1 // pred_region
      %s45 = ssub.s32 64, 64
      %46 = vsyncadd [#allocation6], %s45
      %s48 = sshll.u32 [#allocation5], 4
      %s49 = int_to_ptr.vmem [resolvable:$true] %s48
      %51 = dma.hbm_to_vmem [thread:$0]  %s4, 64, %s49, [#allocation6]
    $region21: #{tpu_custom_call.1} parent=1 // pred_fallthru
      _
    // Predicated region
    $region22: #{tpu_custom_call.1} parent=1 // pred_check
      _
    $region23: #{tpu_custom_call.1} parent=1 // pred_check_branch
      %53 = sbr.rel (0) target = $region25
    $region24: #{tpu_custom_call.1} parent=1 // pred_region
      _
    $region25: #{tpu_custom_call.1} parent=1 // pred_fallthru
      _
    // Predicated region
    $region26: #{tpu_custom_call.1} parent=1 // pred_check
      _
    $region27: #{tpu_custom_call.1} parent=1 // pred_check_branch
      %55 = sbr.rel (0) target = $region29
    $region28: #{tpu_custom_call.1} parent=1 // pred_region
      %s57 = ssub.s32 32, 32
      %58 = vsyncadd [#allocation6], %s57
      %s60 = sshll.u32 [#allocation7], 4
      %s61 = int_to_ptr.vmem [resolvable:$true] %s60
      %63 = dma.hbm_to_vmem [thread:$0]  %s6, 32, %s61, [#allocation6]
    $region29: #{tpu_custom_call.1} parent=1 // pred_fallthru
      _
    // Predicated region
    $region30: #{tpu_custom_call.1} parent=1 // pred_check
      _
    $region31: #{tpu_custom_call.1} parent=1 // pred_check_branch
      %65 = sbr.rel (0) target = $region33
    $region32: #{tpu_custom_call.1} parent=1 // pred_region
      _
    $region33: #{tpu_custom_call.1} parent=1 // pred_fallthru
      _
    // Predicated region
    $region34: #{tpu_custom_call.1} parent=1 // pred_check
      _
    $region35: #{tpu_custom_call.1} parent=1 // pred_check_branch
      %67 = sbr.rel (0) target = $region37
    $region36: #{tpu_custom_call.1} parent=1 // pred_region
      %s69 = ssub.s32 512, 512
      %70 = vsyncadd [#allocation9], %s69
      %s71 = sshll.u32 [#allocation8], 4
      %s72 = int_to_ptr.vmem [resolvable:$true] %s71
      %77 = dma.hbm_to_vmem [thread:$0]  %s8, 512, %s72, [#allocation9], 128, 128, 8
    $region37: #{tpu_custom_call.1} parent=1 // pred_fallthru
      _
    // Predicated region
    $region38: #{tpu_custom_call.1} parent=1 // pred_check
      _
    $region39: #{tpu_custom_call.1} parent=1 // pred_check_branch
      %79 = sbr.rel (0) target = $region41
    $region40: #{tpu_custom_call.1} parent=1 // pred_region
      _
    $region41: #{tpu_custom_call.1} parent=1 // pred_fallthru
      _
    // Predicated region
    $region42: #{tpu_custom_call.1} parent=1 // pred_check
      _
    $region43: #{tpu_custom_call.1} parent=1 // pred_check_branch
      %81 = sbr.rel (0) target = $region45
    $region44: #{tpu_custom_call.1} parent=1 // pred_region
      _
    $region45: #{tpu_custom_call.1} parent=1 // pred_fallthru
      _
    // Predicated region
    $region46: #{tpu_custom_call.1} parent=1 // pred_check
      _
    $region47: #{tpu_custom_call.1} parent=1 // pred_check_branch
      %83 = sbr.rel (0) target = $region49
    $region48: #{tpu_custom_call.1} parent=1 // pred_region
      %s85 = ssub.s32 512, 512
      %86 = vsyncadd [#allocation9], %s85
      %s87 = sshll.u32 [#allocation10], 4
      %s88 = int_to_ptr.vmem [resolvable:$true] %s87
      %93 = dma.hbm_to_vmem [thread:$0]  %s11, 512, %s88, [#allocation9], 128, 128, 8
    $region49: #{tpu_custom_call.1} parent=1 // pred_fallthru
      _
    // Predicated region
    $region50: #{tpu_custom_call.1} parent=1 // pred_check
      _
    $region51: #{tpu_custom_call.1} parent=1 // pred_check_branch
      %95 = sbr.rel (0) target = $region53
    $region52: #{tpu_custom_call.1} parent=1 // pred_region
      _
    $region53: #{tpu_custom_call.1} parent=1 // pred_fallthru
      _
    // Predicated region
    $region54: #{tpu_custom_call.1} parent=1 // pred_check
      _
    $region55: #{tpu_custom_call.1} parent=1 // pred_check_branch
      %97 = sbr.rel (0) target = $region57
    $region56: #{tpu_custom_call.1} parent=1 // pred_region
      %98 = dma.done [#allocation3], 32
    $region57: #{tpu_custom_call.1} parent=1 // pred_fallthru
      _
    // Predicated region
    $region58: #{tpu_custom_call.1} parent=1 // pred_check
      _
    $region59: #{tpu_custom_call.1} parent=1 // pred_check_branch
      %100 = sbr.rel (0) target = $region61
    $region60: #{tpu_custom_call.1} parent=1 // pred_region
      %101 = dma.done [#allocation6], 64
    $region61: #{tpu_custom_call.1} parent=1 // pred_fallthru
      _
    // Predicated region
    $region62: #{tpu_custom_call.1} parent=1 // pred_check
      _
    $region63: #{tpu_custom_call.1} parent=1 // pred_check_branch
      %103 = sbr.rel (0) target = $region65
    $region64: #{tpu_custom_call.1} parent=1 // pred_region
      %104 = dma.done [#allocation6], 32
    $region65: #{tpu_custom_call.1} parent=1 // pred_fallthru
      _
    // Predicated region
    $region66: #{tpu_custom_call.1} parent=1 // pred_check
      _
    $region67: #{tpu_custom_call.1} parent=1 // pred_check_branch
      %106 = sbr.rel (0) target = $region69
    $region68: #{tpu_custom_call.1} parent=1 // pred_region
      %107 = dma.done [#allocation9], 512
    $region69: #{tpu_custom_call.1} parent=1 // pred_fallthru
      _
    // Predicated region
    $region70: #{tpu_custom_call.1} parent=1 // pred_check
      _
    $region71: #{tpu_custom_call.1} parent=1 // pred_check_branch
      %109 = sbr.rel (0) target = $region73
    $region72: #{tpu_custom_call.1} parent=1 // pred_region
      %110 = dma.done [#allocation9], 512
    $region73: #{tpu_custom_call.1} parent=1 // pred_fallthru
      _
    %v111 = vld [vmem:[%s0] sm:$0xff]
    %v112 = vld [vmem:[%s0 + $0x8] sm:$0xff]
    %v113 = vld [vmem:[%s1] sm:$0x3]
    %v114 = vld [vmem:[%s2] sm:$0xff]
    %v115 = vld [vmem:[%s2 + $0x8] sm:$0xff]
    %v116 = vld [vmem:[#allocation2] sm:$0x3]
    %v117 = vld [vmem:[#allocation7] sm:$0x3]
    %v118 = vld [vmem:[#allocation5] sm:$0x7]
    %v119 = vlaneseq
    %v120 = vshrl.u32 %v119, 7
    %v121 = vsub.s32 0, %v120
    %v122 = vrot.slane %v117, %v121
    %vm123 = vcmask 23552
    %v125 = vsel %vm123, %v111, 0
    %v128 = vsel %vm123, %v112, 0
    %vm130 = vcmask 1042432
    %v132 = vsel %vm130, %v118, 0
    %134 = vmatprep.subr.mxu0 0.0
    %135 = vmatpush1.msra.mxu0 %v132
    %136 = vmatprep.subr.mxu0 0.0
    %137 = vmatpush1.msra.mxu0 0.0
    %138 = vmatprep.subr.mxu0 0.0
    %139 = vmatpush1.msra.mxu0 0.0
    %140 = vmatprep.subr.mxu0 0.0
    %141 = vmatpush1.msra.mxu0 0.0
    %142 = vmatprep.subr.mxu0 0.0
    %143 = vmatpush1.msra.mxu0 0.0
    %144 = vmatprep.subr.mxu0 0.0
    %145 = vmatpush1.msra.mxu0 0.0
    %146 = vmatprep.subr.mxu0 0.0
    %147 = vmatpush1.msra.mxu0 0.0
    %148 = vmatprep.subr.mxu0 0.0
    %149 = vmatpush1.msra.mxu0 0.0
    %150 = vmatprep.subr.mxu0 0.0
    %151 = vmatpush1.msra.mxu0 0.0
    %152 = vmatprep.subr.mxu0 0.0
    %153 = vmatpush1.msra.mxu0 0.0
    %154 = vmatprep.subr.mxu0 0.0
    %155 = vmatpush1.msra.mxu0 0.0
    %156 = vmatprep.subr.mxu0 0.0
    %157 = vmatpush1.msra.mxu0 0.0
    %158 = vmatprep.subr.mxu0 0.0
    %159 = vmatpush1.msra.mxu0 0.0
    %160 = vmatprep.subr.mxu0 0.0
    %161 = vmatpush1.msra.mxu0 0.0
    %162 = vmatprep.subr.mxu0 0.0
    %163 = vmatpush1.msra.mxu0 0.0
    %164 = vmatprep.subr.mxu0 0.0
    %165 = vmatpush1.msra.mxu0 0.0
    %166 = vmatprep.subr.mxu0 0.0
    %167 = vmatpush1.msra.mxu0 0.0
    %168 = vmatprep.subr.mxu0 0.0
    %169 = vmatpush1.msra.mxu0 0.0
    %170 = vmatprep.subr.mxu0 0.0
    %171 = vmatpush1.msra.mxu0 0.0
    %172 = vmatprep.subr.mxu0 0.0
    %173 = vmatpush1.msra.mxu0 0.0
    %174 = vmatprep.subr.mxu0 0.0
    %175 = vmatpush1.msra.mxu0 0.0
    %176 = vmatprep.subr.mxu0 0.0
    %177 = vmatpush1.msra.mxu0 0.0
    %178 = vmatprep.subr.mxu0 0.0
    %179 = vmatpush1.msra.mxu0 0.0
    %180 = vmatprep.subr.mxu0 0.0
    %181 = vmatpush1.msra.mxu0 0.0
    %182 = vmatprep.subr.mxu0 0.0
    %183 = vmatpush1.msra.mxu0 0.0
    %184 = vmatprep.subr.mxu0 0.0
    %185 = vmatpush1.msra.mxu0 0.0
    %186 = vmatprep.subr.mxu0 0.0
    %187 = vmatpush1.msra.mxu0 0.0
    %188 = vmatprep.subr.mxu0 0.0
    %189 = vmatpush1.msra.mxu0 0.0
    %190 = vmatprep.subr.mxu0 0.0
    %191 = vmatpush1.msra.mxu0 0.0
    %192 = vmatprep.subr.mxu0 0.0
    %193 = vmatpush1.msra.mxu0 0.0
    %194 = vmatprep.subr.mxu0 0.0
    %195 = vmatpush1.msra.mxu0 0.0
    %196 = vmatprep.subr.mxu0 0.0
    %197 = vmatpush1.msra.mxu0 0.0
    %198 = vmatprep.mubr.f32.mxu0 0.0
    %199 = vmatmul.mubr.f32.gmra.mrb[0].mxu0 %v125
    %v200 = vpop.f32.mrb[0].mxu0
    %v201 = vadd.f32 %v122, %v200
    %v202 = vpop.f32.mrb[0].mxu0
    %203 = vmatprep.mubr.f32.mxu0 0.0
    %204 = vmatmul.mubr.f32.gmra.mrb[0].mxu0 %v128
    %v205 = vpop.f32.mrb[0].mxu0
    %v206 = vadd.f32 %v122, %v205
    %v207 = vpop.f32.mrb[0].mxu0
    %208 = vdwg.mxu0
    %v209 = vmax.f32 %v201, 0.0
    %v210 = vmax.f32 %v206, 0.0
    %v211 = vld [vmem:[%s5] sm:$0xff]
    %v212 = vld [vmem:[%s5 + $0x8] sm:$0xff]
    %v213 = vld [vmem:[%s5 + $0x10] sm:$0xff]
    %v214 = vld [vmem:[%s5 + $0x18] sm:$0xff]
    %v215 = vlaneseq
    %v216 = vshrl.u32 %v215, 7
    %v217 = vsub.s32 1, %v216
    %v218 = vrot.slane %v117, %v217
    %vm219 = vcmask 261120
    %v221 = vsel %vm219, %v209, 0
    %v224 = vsel %vm219, %v210, 0
    %226 = vmatprep.subr.mxu0 0.0
    %227 = vmatpush1.msra.mxu0 %v211
    %228 = vmatprep.subr.mxu0 0.0
    %229 = vmatpush1.msra.mxu0 %v212
    %230 = vmatprep.subr.mxu0 0.0
    %231 = vmatpush1.msra.mxu0 %v213
    %232 = vmatprep.subr.mxu0 0.0
    %233 = vmatpush1.msra.mxu0 %v214
    %234 = vmatprep.subr.mxu0 0.0
    %235 = vmatpush1.msra.mxu0 0.0
    %236 = vmatprep.subr.mxu0 0.0
    %237 = vmatpush1.msra.mxu0 0.0
    %238 = vmatprep.subr.mxu0 0.0
    %239 = vmatpush1.msra.mxu0 0.0
    %240 = vmatprep.subr.mxu0 0.0
    %241 = vmatpush1.msra.mxu0 0.0
    %242 = vmatprep.subr.mxu0 0.0
    %243 = vmatpush1.msra.mxu0 0.0
    %244 = vmatprep.subr.mxu0 0.0
    %245 = vmatpush1.msra.mxu0 0.0
    %246 = vmatprep.subr.mxu0 0.0
    %247 = vmatpush1.msra.mxu0 0.0
    %248 = vmatprep.subr.mxu0 0.0
    %249 = vmatpush1.msra.mxu0 0.0
    %250 = vmatprep.subr.mxu0 0.0
    %251 = vmatpush1.msra.mxu0 0.0
    %252 = vmatprep.subr.mxu0 0.0
    %253 = vmatpush1.msra.mxu0 0.0
    %254 = vmatprep.subr.mxu0 0.0
    %255 = vmatpush1.msra.mxu0 0.0
    %256 = vmatprep.subr.mxu0 0.0
    %257 = vmatpush1.msra.mxu0 0.0
    %258 = vmatprep.subr.mxu0 0.0
    %259 = vmatpush1.msra.mxu0 0.0
    %260 = vmatprep.subr.mxu0 0.0
    %261 = vmatpush1.msra.mxu0 0.0
    %262 = vmatprep.subr.mxu0 0.0
    %263 = vmatpush1.msra.mxu0 0.0
    %264 = vmatprep.subr.mxu0 0.0
    %265 = vmatpush1.msra.mxu0 0.0
    %266 = vmatprep.subr.mxu0 0.0
    %267 = vmatpush1.msra.mxu0 0.0
    %268 = vmatprep.subr.mxu0 0.0
    %269 = vmatpush1.msra.mxu0 0.0
    %270 = vmatprep.subr.mxu0 0.0
    %271 = vmatpush1.msra.mxu0 0.0
    %272 = vmatprep.subr.mxu0 0.0
    %273 = vmatpush1.msra.mxu0 0.0
    %274 = vmatprep.subr.mxu0 0.0
    %275 = vmatpush1.msra.mxu0 0.0
    %276 = vmatprep.subr.mxu0 0.0
    %277 = vmatpush1.msra.mxu0 0.0
    %278 = vmatprep.subr.mxu0 0.0
    %279 = vmatpush1.msra.mxu0 0.0
    %280 = vmatprep.subr.mxu0 0.0
    %281 = vmatpush1.msra.mxu0 0.0
    %282 = vmatprep.subr.mxu0 0.0
    %283 = vmatpush1.msra.mxu0 0.0
    %284 = vmatprep.subr.mxu0 0.0
    %285 = vmatpush1.msra.mxu0 0.0
    %286 = vmatprep.subr.mxu0 0.0
    %287 = vmatpush1.msra.mxu0 0.0
    %288 = vmatprep.subr.mxu0 0.0
    %289 = vmatpush1.msra.mxu0 0.0
    %290 = vmatprep.mubr.f32.mxu0 0.0
    %291 = vmatmul.mubr.f32.gmra.mrb[0].mxu0 %v221
    %v292 = vpop.f32.mrb[0].mxu0
    %v293 = vadd.f32 %v218, %v292
    %v294 = vpop.f32.mrb[0].mxu0
    %295 = vmatprep.mubr.f32.mxu0 0.0
    %296 = vmatmul.mubr.f32.gmra.mrb[0].mxu0 %v224
    %v297 = vpop.f32.mrb[0].mxu0
    %v298 = vadd.f32 %v218, %v297
    %v299 = vpop.f32.mrb[0].mxu0
    %300 = vdwg.mxu0
    %vm301 = vcmask 130048
    %v303 = vsel %vm301, %v113, 0
    %305 = vmatprep.subr.mxu0 0.0
    %306 = vmatpush1.msra.mxu0 %v293
    %307 = vmatprep.subr.mxu0 0.0
    %308 = vmatpush1.msra.mxu0 %v298
    %309 = vmatprep.subr.mxu0 0.0
    %310 = vmatpush1.msra.mxu0 0.0
    %311 = vmatprep.subr.mxu0 0.0
    %312 = vmatpush1.msra.mxu0 0.0
    %313 = vmatprep.subr.mxu0 0.0
    %314 = vmatpush1.msra.mxu0 0.0
    %315 = vmatprep.subr.mxu0 0.0
    %316 = vmatpush1.msra.mxu0 0.0
    %317 = vmatprep.subr.mxu0 0.0
    %318 = vmatpush1.msra.mxu0 0.0
    %319 = vmatprep.subr.mxu0 0.0
    %320 = vmatpush1.msra.mxu0 0.0
    %321 = vmatprep.subr.mxu0 0.0
    %322 = vmatpush1.msra.mxu0 0.0
    %323 = vmatprep.subr.mxu0 0.0
    %324 = vmatpush1.msra.mxu0 0.0
    %325 = vmatprep.subr.mxu0 0.0
    %326 = vmatpush1.msra.mxu0 0.0
    %327 = vmatprep.subr.mxu0 0.0
    %328 = vmatpush1.msra.mxu0 0.0
    %329 = vmatprep.subr.mxu0 0.0
    %330 = vmatpush1.msra.mxu0 0.0
    %331 = vmatprep.subr.mxu0 0.0
    %332 = vmatpush1.msra.mxu0 0.0
    %333 = vmatprep.subr.mxu0 0.0
    %334 = vmatpush1.msra.mxu0 0.0
    %335 = vmatprep.subr.mxu0 0.0
    %336 = vmatpush1.msra.mxu0 0.0
    %337 = vmatprep.subr.mxu0 0.0
    %338 = vmatpush1.msra.mxu0 0.0
    %339 = vmatprep.subr.mxu0 0.0
    %340 = vmatpush1.msra.mxu0 0.0
    %341 = vmatprep.subr.mxu0 0.0
    %342 = vmatpush1.msra.mxu0 0.0
    %343 = vmatprep.subr.mxu0 0.0
    %344 = vmatpush1.msra.mxu0 0.0
    %345 = vmatprep.subr.mxu0 0.0
    %346 = vmatpush1.msra.mxu0 0.0
    %347 = vmatprep.subr.mxu0 0.0
    %348 = vmatpush1.msra.mxu0 0.0
    %349 = vmatprep.subr.mxu0 0.0
    %350 = vmatpush1.msra.mxu0 0.0
    %351 = vmatprep.subr.mxu0 0.0
    %352 = vmatpush1.msra.mxu0 0.0
    %353 = vmatprep.subr.mxu0 0.0
    %354 = vmatpush1.msra.mxu0 0.0
    %355 = vmatprep.subr.mxu0 0.0
    %356 = vmatpush1.msra.mxu0 0.0
    %357 = vmatprep.subr.mxu0 0.0
    %358 = vmatpush1.msra.mxu0 0.0
    %359 = vmatprep.subr.mxu0 0.0
    %360 = vmatpush1.msra.mxu0 0.0
    %361 = vmatprep.subr.mxu0 0.0
    %362 = vmatpush1.msra.mxu0 0.0
    %363 = vmatprep.subr.mxu0 0.0
    %364 = vmatpush1.msra.mxu0 0.0
    %365 = vmatprep.subr.mxu0 0.0
    %366 = vmatpush1.msra.mxu0 0.0
    %367 = vmatprep.subr.mxu0 0.0
    %368 = vmatpush1.msra.mxu0 0.0
    %369 = vmatprep.mubr.f32.mxu0 0.0
    %370 = vmatmul.mubr.f32.gmra.mrb[0].mxu0 %v303
    %v371 = vpop.f32.mrb[0].mxu0
    %v372 = vadd.f32 0.0, %v371
    %v373 = vpop.f32.mrb[0].mxu0
    %374 = vdwg.mxu0
    %v375 = vld [vmem:[%s9] sm:$0x3]
    %v376 = vld [vmem:[%s7] sm:$0xff]
    %v377 = vld [vmem:[%s7 + $0x8] sm:$0xff]
    %v378 = vld [vmem:[%s7 + $0x10] sm:$0xff]
    %v379 = vld [vmem:[%s7 + $0x18] sm:$0xff]
    %v380 = vlaneseq
    %v381 = vshrl.u32 %v380, 7
    %v382 = vsub.s32 0, %v381
    %v383 = vrot.slane %v375, %v382
    %v385 = vsel %vm219, %v372, 0
    %387 = vmatprep.subr.mxu0 0.0
    %388 = vmatpush1.msra.mxu0 %v376
    %389 = vmatprep.subr.mxu0 0.0
    %390 = vmatpush1.msra.mxu0 %v377
    %391 = vmatprep.subr.mxu0 0.0
    %392 = vmatpush1.msra.mxu0 %v378
    %393 = vmatprep.subr.mxu0 0.0
    %394 = vmatpush1.msra.mxu0 %v379
    %395 = vmatprep.subr.mxu0 0.0
    %396 = vmatpush1.msra.mxu0 0.0
    %397 = vmatprep.subr.mxu0 0.0
    %398 = vmatpush1.msra.mxu0 0.0
    %399 = vmatprep.subr.mxu0 0.0
    %400 = vmatpush1.msra.mxu0 0.0
    %401 = vmatprep.subr.mxu0 0.0
    %402 = vmatpush1.msra.mxu0 0.0
    %403 = vmatprep.subr.mxu0 0.0
    %404 = vmatpush1.msra.mxu0 0.0
    %405 = vmatprep.subr.mxu0 0.0
    %406 = vmatpush1.msra.mxu0 0.0
    %407 = vmatprep.subr.mxu0 0.0
    %408 = vmatpush1.msra.mxu0 0.0
    %409 = vmatprep.subr.mxu0 0.0
    %410 = vmatpush1.msra.mxu0 0.0
    %411 = vmatprep.subr.mxu0 0.0
    %412 = vmatpush1.msra.mxu0 0.0
    %413 = vmatprep.subr.mxu0 0.0
    %414 = vmatpush1.msra.mxu0 0.0
    %415 = vmatprep.subr.mxu0 0.0
    %416 = vmatpush1.msra.mxu0 0.0
    %417 = vmatprep.subr.mxu0 0.0
    %418 = vmatpush1.msra.mxu0 0.0
    %419 = vmatprep.subr.mxu0 0.0
    %420 = vmatpush1.msra.mxu0 0.0
    %421 = vmatprep.subr.mxu0 0.0
    %422 = vmatpush1.msra.mxu0 0.0
    %423 = vmatprep.subr.mxu0 0.0
    %424 = vmatpush1.msra.mxu0 0.0
    %425 = vmatprep.subr.mxu0 0.0
    %426 = vmatpush1.msra.mxu0 0.0
    %427 = vmatprep.subr.mxu0 0.0
    %428 = vmatpush1.msra.mxu0 0.0
    %429 = vmatprep.subr.mxu0 0.0
    %430 = vmatpush1.msra.mxu0 0.0
    %431 = vmatprep.subr.mxu0 0.0
    %432 = vmatpush1.msra.mxu0 0.0
    %433 = vmatprep.subr.mxu0 0.0
    %434 = vmatpush1.msra.mxu0 0.0
    %435 = vmatprep.subr.mxu0 0.0
    %436 = vmatpush1.msra.mxu0 0.0
    %437 = vmatprep.subr.mxu0 0.0
    %438 = vmatpush1.msra.mxu0 0.0
    %439 = vmatprep.subr.mxu0 0.0
    %440 = vmatpush1.msra.mxu0 0.0
    %441 = vmatprep.subr.mxu0 0.0
    %442 = vmatpush1.msra.mxu0 0.0
    %443 = vmatprep.subr.mxu0 0.0
    %444 = vmatpush1.msra.mxu0 0.0
    %445 = vmatprep.subr.mxu0 0.0
    %446 = vmatpush1.msra.mxu0 0.0
    %447 = vmatprep.subr.mxu0 0.0
    %448 = vmatpush1.msra.mxu0 0.0
    %449 = vmatprep.subr.mxu0 0.0
    %450 = vmatpush1.msra.mxu0 0.0
    %451 = vmatprep.mubr.f32.mxu0 0.0
    %452 = vmatmul.mubr.f32.gmra.mrb[0].mxu0 %v385
    %v453 = vpop.f32.mrb[0].mxu0
    %v454 = vadd.f32 %v383, %v453
    %v455 = vpop.f32.mrb[0].mxu0
    %456 = vdwg.mxu0
    %v457 = vmax.f32 %v454, 0.0
    %v458 = vld [vmem:[#allocation8] sm:$0xff]
    %v459 = vld [vmem:[#allocation8 + $0x8] sm:$0xff]
    %v460 = vld [vmem:[#allocation8 + $0x10] sm:$0xff]
    %v461 = vld [vmem:[#allocation8 + $0x18] sm:$0xff]
    %v462 = vlaneseq
    %v463 = vshrl.u32 %v462, 7
    %v464 = vsub.s32 1, %v463
    %v465 = vrot.slane %v375, %v464
    %v467 = vsel %vm219, %v457, 0
    %469 = vmatprep.subr.mxu0 0.0
    %470 = vmatpush1.msra.mxu0 %v458
    %471 = vmatprep.subr.mxu0 0.0
    %472 = vmatpush1.msra.mxu0 %v459
    %473 = vmatprep.subr.mxu0 0.0
    %474 = vmatpush1.msra.mxu0 %v460
    %475 = vmatprep.subr.mxu0 0.0
    %476 = vmatpush1.msra.mxu0 %v461
    %477 = vmatprep.subr.mxu0 0.0
    %478 = vmatpush1.msra.mxu0 0.0
    %479 = vmatprep.subr.mxu0 0.0
    %480 = vmatpush1.msra.mxu0 0.0
    %481 = vmatprep.subr.mxu0 0.0
    %482 = vmatpush1.msra.mxu0 0.0
    %483 = vmatprep.subr.mxu0 0.0
    %484 = vmatpush1.msra.mxu0 0.0
    %485 = vmatprep.subr.mxu0 0.0
    %486 = vmatpush1.msra.mxu0 0.0
    %487 = vmatprep.subr.mxu0 0.0
    %488 = vmatpush1.msra.mxu0 0.0
    %489 = vmatprep.subr.mxu0 0.0
    %490 = vmatpush1.msra.mxu0 0.0
    %491 = vmatprep.subr.mxu0 0.0
    %492 = vmatpush1.msra.mxu0 0.0
    %493 = vmatprep.subr.mxu0 0.0
    %494 = vmatpush1.msra.mxu0 0.0
    %495 = vmatprep.subr.mxu0 0.0
    %496 = vmatpush1.msra.mxu0 0.0
    %497 = vmatprep.subr.mxu0 0.0
    %498 = vmatpush1.msra.mxu0 0.0
    %499 = vmatprep.subr.mxu0 0.0
    %500 = vmatpush1.msra.mxu0 0.0
    %501 = vmatprep.subr.mxu0 0.0
    %502 = vmatpush1.msra.mxu0 0.0
    %503 = vmatprep.subr.mxu0 0.0
    %504 = vmatpush1.msra.mxu0 0.0
    %505 = vmatprep.subr.mxu0 0.0
    %506 = vmatpush1.msra.mxu0 0.0
    %507 = vmatprep.subr.mxu0 0.0
    %508 = vmatpush1.msra.mxu0 0.0
    %509 = vmatprep.subr.mxu0 0.0
    %510 = vmatpush1.msra.mxu0 0.0
    %511 = vmatprep.subr.mxu0 0.0
    %512 = vmatpush1.msra.mxu0 0.0
    %513 = vmatprep.subr.mxu0 0.0
    %514 = vmatpush1.msra.mxu0 0.0
    %515 = vmatprep.subr.mxu0 0.0
    %516 = vmatpush1.msra.mxu0 0.0
    %517 = vmatprep.subr.mxu0 0.0
    %518 = vmatpush1.msra.mxu0 0.0
    %519 = vmatprep.subr.mxu0 0.0
    %520 = vmatpush1.msra.mxu0 0.0
    %521 = vmatprep.subr.mxu0 0.0
    %522 = vmatpush1.msra.mxu0 0.0
    %523 = vmatprep.subr.mxu0 0.0
    %524 = vmatpush1.msra.mxu0 0.0
    %525 = vmatprep.subr.mxu0 0.0
    %526 = vmatpush1.msra.mxu0 0.0
    %527 = vmatprep.subr.mxu0 0.0
    %528 = vmatpush1.msra.mxu0 0.0
    %529 = vmatprep.subr.mxu0 0.0
    %530 = vmatpush1.msra.mxu0 0.0
    %531 = vmatprep.subr.mxu0 0.0
    %532 = vmatpush1.msra.mxu0 0.0
    %533 = vmatprep.mubr.f32.mxu0 0.0
    %534 = vmatmul.mubr.f32.gmra.mrb[0].mxu0 %v467
    %v535 = vpop.f32.mrb[0].mxu0
    %v536 = vadd.f32 %v465, %v535
    %v537 = vpop.f32.mrb[0].mxu0
    %538 = vdwg.mxu0
    %v539 = vlaneseq
    %v540 = vand.u32 %v539, 127
    %vm541 = vcmp.lt.s32.totalorder %v540, 16
    %v542 = vxor.u32 %v536, 2147483648
    %v543 = vmul.f32 %v542, 1.442695
    %v544 = vpow.pop %v543
    %v545 = vadd.f32 %v544, 1.0
    %v546 = vrcp.pop %v545
    %v547 = vmul.f32 1.0, %v546
    %v548 = vmul.f32 %v547, 0.9
    %v549 = vadd.f32 %v548, 0.1
    %v550 = vsel %vm541, %v536, %v549
    %vm551 = vcmask 254976
    %552 = vst.msk [vmem:[#allocation11] sm:$0x3] %vm551, %v550
    %v553 = vld [vmem:[#allocation7] sm:$0x3]
    %v554 = vld [vmem:[#allocation5] sm:$0x7]
    %v555 = vlaneseq
    %v556 = vshrl.u32 %v555, 7
    %v557 = vsub.s32 0, %v556
    %v558 = vrot.slane %v553, %v557
    %v560 = vsel %vm123, %v114, 0
    %v563 = vsel %vm123, %v115, 0
    %v566 = vsel %vm130, %v554, 0
    %568 = vmatprep.subr.mxu0 0.0
    %569 = vmatpush1.msra.mxu0 %v566
    %570 = vmatprep.subr.mxu0 0.0
    %571 = vmatpush1.msra.mxu0 0.0
    %572 = vmatprep.subr.mxu0 0.0
    %573 = vmatpush1.msra.mxu0 0.0
    %574 = vmatprep.subr.mxu0 0.0
    %575 = vmatpush1.msra.mxu0 0.0
    %576 = vmatprep.subr.mxu0 0.0
    %577 = vmatpush1.msra.mxu0 0.0
    %578 = vmatprep.subr.mxu0 0.0
    %579 = vmatpush1.msra.mxu0 0.0
    %580 = vmatprep.subr.mxu0 0.0
    %581 = vmatpush1.msra.mxu0 0.0
    %582 = vmatprep.subr.mxu0 0.0
    %583 = vmatpush1.msra.mxu0 0.0
    %584 = vmatprep.subr.mxu0 0.0
    %585 = vmatpush1.msra.mxu0 0.0
    %586 = vmatprep.subr.mxu0 0.0
    %587 = vmatpush1.msra.mxu0 0.0
    %588 = vmatprep.subr.mxu0 0.0
    %589 = vmatpush1.msra.mxu0 0.0
    %590 = vmatprep.subr.mxu0 0.0
    %591 = vmatpush1.msra.mxu0 0.0
    %592 = vmatprep.subr.mxu0 0.0
    %593 = vmatpush1.msra.mxu0 0.0
    %594 = vmatprep.subr.mxu0 0.0
    %595 = vmatpush1.msra.mxu0 0.0
    %596 = vmatprep.subr.mxu0 0.0
    %597 = vmatpush1.msra.mxu0 0.0
    %598 = vmatprep.subr.mxu0 0.0
    %599 = vmatpush1.msra.mxu0 0.0
    %600 = vmatprep.subr.mxu0 0.0
    %601 = vmatpush1.msra.mxu0 0.0
    %602 = vmatprep.subr.mxu0 0.0
    %603 = vmatpush1.msra.mxu0 0.0
    %604 = vmatprep.subr.mxu0 0.0
    %605 = vmatpush1.msra.mxu0 0.0
    %606 = vmatprep.subr.mxu0 0.0
    %607 = vmatpush1.msra.mxu0 0.0
    %608 = vmatprep.subr.mxu0 0.0
    %609 = vmatpush1.msra.mxu0 0.0
    %610 = vmatprep.subr.mxu0 0.0
    %611 = vmatpush1.msra.mxu0 0.0
    %612 = vmatprep.subr.mxu0 0.0
    %613 = vmatpush1.msra.mxu0 0.0
    %614 = vmatprep.subr.mxu0 0.0
    %615 = vmatpush1.msra.mxu0 0.0
    %616 = vmatprep.subr.mxu0 0.0
    %617 = vmatpush1.msra.mxu0 0.0
    %618 = vmatprep.subr.mxu0 0.0
    %619 = vmatpush1.msra.mxu0 0.0
    %620 = vmatprep.subr.mxu0 0.0
    %621 = vmatpush1.msra.mxu0 0.0
    %622 = vmatprep.subr.mxu0 0.0
    %623 = vmatpush1.msra.mxu0 0.0
    %624 = vmatprep.subr.mxu0 0.0
    %625 = vmatpush1.msra.mxu0 0.0
    %626 = vmatprep.subr.mxu0 0.0
    %627 = vmatpush1.msra.mxu0 0.0
    %628 = vmatprep.subr.mxu0 0.0
    %629 = vmatpush1.msra.mxu0 0.0
    %630 = vmatprep.subr.mxu0 0.0
    %631 = vmatpush1.msra.mxu0 0.0
    %632 = vmatprep.mubr.f32.mxu0 0.0
    %633 = vmatmul.mubr.f32.gmra.mrb[0].mxu0 %v560
    %v634 = vpop.f32.mrb[0].mxu0
    %v635 = vadd.f32 %v558, %v634
    %v636 = vpop.f32.mrb[0].mxu0
    %637 = vmatprep.mubr.f32.mxu0 0.0
    %638 = vmatmul.mubr.f32.gmra.mrb[0].mxu0 %v563
    %v639 = vpop.f32.mrb[0].mxu0
    %v640 = vadd.f32 %v558, %v639
    %v641 = vpop.f32.mrb[0].mxu0
    %642 = vdwg.mxu0
    %v643 = vmax.f32 %v635, 0.0
    %v644 = vmax.f32 %v640, 0.0
    %v645 = vld [vmem:[%s5] sm:$0xff]
    %v646 = vld [vmem:[%s5 + $0x8] sm:$0xff]
    %v647 = vld [vmem:[%s5 + $0x10] sm:$0xff]
    %v648 = vld [vmem:[%s5 + $0x18] sm:$0xff]
    %v649 = vlaneseq
    %v650 = vshrl.u32 %v649, 7
    %v651 = vsub.s32 1, %v650
    %v652 = vrot.slane %v553, %v651
    %v654 = vsel %vm219, %v643, 0
    %v657 = vsel %vm219, %v644, 0
    %659 = vmatprep.subr.mxu0 0.0
    %660 = vmatpush1.msra.mxu0 %v645
    %661 = vmatprep.subr.mxu0 0.0
    %662 = vmatpush1.msra.mxu0 %v646
    %663 = vmatprep.subr.mxu0 0.0
    %664 = vmatpush1.msra.mxu0 %v647
    %665 = vmatprep.subr.mxu0 0.0
    %666 = vmatpush1.msra.mxu0 %v648
    %667 = vmatprep.subr.mxu0 0.0
    %668 = vmatpush1.msra.mxu0 0.0
    %669 = vmatprep.subr.mxu0 0.0
    %670 = vmatpush1.msra.mxu0 0.0
    %671 = vmatprep.subr.mxu0 0.0
    %672 = vmatpush1.msra.mxu0 0.0
    %673 = vmatprep.subr.mxu0 0.0
    %674 = vmatpush1.msra.mxu0 0.0
    %675 = vmatprep.subr.mxu0 0.0
    %676 = vmatpush1.msra.mxu0 0.0
    %677 = vmatprep.subr.mxu0 0.0
    %678 = vmatpush1.msra.mxu0 0.0
    %679 = vmatprep.subr.mxu0 0.0
    %680 = vmatpush1.msra.mxu0 0.0
    %681 = vmatprep.subr.mxu0 0.0
    %682 = vmatpush1.msra.mxu0 0.0
    %683 = vmatprep.subr.mxu0 0.0
    %684 = vmatpush1.msra.mxu0 0.0
    %685 = vmatprep.subr.mxu0 0.0
    %686 = vmatpush1.msra.mxu0 0.0
    %687 = vmatprep.subr.mxu0 0.0
    %688 = vmatpush1.msra.mxu0 0.0
    %689 = vmatprep.subr.mxu0 0.0
    %690 = vmatpush1.msra.mxu0 0.0
    %691 = vmatprep.subr.mxu0 0.0
    %692 = vmatpush1.msra.mxu0 0.0
    %693 = vmatprep.subr.mxu0 0.0
    %694 = vmatpush1.msra.mxu0 0.0
    %695 = vmatprep.subr.mxu0 0.0
    %696 = vmatpush1.msra.mxu0 0.0
    %697 = vmatprep.subr.mxu0 0.0
    %698 = vmatpush1.msra.mxu0 0.0
    %699 = vmatprep.subr.mxu0 0.0
    %700 = vmatpush1.msra.mxu0 0.0
    %701 = vmatprep.subr.mxu0 0.0
    %702 = vmatpush1.msra.mxu0 0.0
    %703 = vmatprep.subr.mxu0 0.0
    %704 = vmatpush1.msra.mxu0 0.0
    %705 = vmatprep.subr.mxu0 0.0
    %706 = vmatpush1.msra.mxu0 0.0
    %707 = vmatprep.subr.mxu0 0.0
    %708 = vmatpush1.msra.mxu0 0.0
    %709 = vmatprep.subr.mxu0 0.0
    %710 = vmatpush1.msra.mxu0 0.0
    %711 = vmatprep.subr.mxu0 0.0
    %712 = vmatpush1.msra.mxu0 0.0
    %713 = vmatprep.subr.mxu0 0.0
    %714 = vmatpush1.msra.mxu0 0.0
    %715 = vmatprep.subr.mxu0 0.0
    %716 = vmatpush1.msra.mxu0 0.0
    %717 = vmatprep.subr.mxu0 0.0
    %718 = vmatpush1.msra.mxu0 0.0
    %719 = vmatprep.subr.mxu0 0.0
    %720 = vmatpush1.msra.mxu0 0.0
    %721 = vmatprep.subr.mxu0 0.0
    %722 = vmatpush1.msra.mxu0 0.0
    %723 = vmatprep.mubr.f32.mxu0 0.0
    %724 = vmatmul.mubr.f32.gmra.mrb[0].mxu0 %v654
    %v725 = vpop.f32.mrb[0].mxu0
    %v726 = vadd.f32 %v652, %v725
    %v727 = vpop.f32.mrb[0].mxu0
    %728 = vmatprep.mubr.f32.mxu0 0.0
    %729 = vmatmul.mubr.f32.gmra.mrb[0].mxu0 %v657
    %v730 = vpop.f32.mrb[0].mxu0
    %v731 = vadd.f32 %v652, %v730
    %v732 = vpop.f32.mrb[0].mxu0
    %733 = vdwg.mxu0
    %v735 = vsel %vm301, %v116, 0
    %737 = vmatprep.subr.mxu0 0.0
    %738 = vmatpush1.msra.mxu0 %v726
    %739 = vmatprep.subr.mxu0 0.0
    %740 = vmatpush1.msra.mxu0 %v731
    %741 = vmatprep.subr.mxu0 0.0
    %742 = vmatpush1.msra.mxu0 0.0
    %743 = vmatprep.subr.mxu0 0.0
    %744 = vmatpush1.msra.mxu0 0.0
    %745 = vmatprep.subr.mxu0 0.0
    %746 = vmatpush1.msra.mxu0 0.0
    %747 = vmatprep.subr.mxu0 0.0
    %748 = vmatpush1.msra.mxu0 0.0
    %749 = vmatprep.subr.mxu0 0.0
    %750 = vmatpush1.msra.mxu0 0.0
    %751 = vmatprep.subr.mxu0 0.0
    %752 = vmatpush1.msra.mxu0 0.0
    %753 = vmatprep.subr.mxu0 0.0
    %754 = vmatpush1.msra.mxu0 0.0
    %755 = vmatprep.subr.mxu0 0.0
    %756 = vmatpush1.msra.mxu0 0.0
    %757 = vmatprep.subr.mxu0 0.0
    %758 = vmatpush1.msra.mxu0 0.0
    %759 = vmatprep.subr.mxu0 0.0
    %760 = vmatpush1.msra.mxu0 0.0
    %761 = vmatprep.subr.mxu0 0.0
    %762 = vmatpush1.msra.mxu0 0.0
    %763 = vmatprep.subr.mxu0 0.0
    %764 = vmatpush1.msra.mxu0 0.0
    %765 = vmatprep.subr.mxu0 0.0
    %766 = vmatpush1.msra.mxu0 0.0
    %767 = vmatprep.subr.mxu0 0.0
    %768 = vmatpush1.msra.mxu0 0.0
    %769 = vmatprep.subr.mxu0 0.0
    %770 = vmatpush1.msra.mxu0 0.0
    %771 = vmatprep.subr.mxu0 0.0
    %772 = vmatpush1.msra.mxu0 0.0
    %773 = vmatprep.subr.mxu0 0.0
    %774 = vmatpush1.msra.mxu0 0.0
    %775 = vmatprep.subr.mxu0 0.0
    %776 = vmatpush1.msra.mxu0 0.0
    %777 = vmatprep.subr.mxu0 0.0
    %778 = vmatpush1.msra.mxu0 0.0
    %779 = vmatprep.subr.mxu0 0.0
    %780 = vmatpush1.msra.mxu0 0.0
    %781 = vmatprep.subr.mxu0 0.0
    %782 = vmatpush1.msra.mxu0 0.0
    %783 = vmatprep.subr.mxu0 0.0
    %784 = vmatpush1.msra.mxu0 0.0
    %785 = vmatprep.subr.mxu0 0.0
    %786 = vmatpush1.msra.mxu0 0.0
    %787 = vmatprep.subr.mxu0 0.0
    %788 = vmatpush1.msra.mxu0 0.0
    %789 = vmatprep.subr.mxu0 0.0
    %790 = vmatpush1.msra.mxu0 0.0
    %791 = vmatprep.subr.mxu0 0.0
    %792 = vmatpush1.msra.mxu0 0.0
    %793 = vmatprep.subr.mxu0 0.0
    %794 = vmatpush1.msra.mxu0 0.0
    %795 = vmatprep.subr.mxu0 0.0
    %796 = vmatpush1.msra.mxu0 0.0
    %797 = vmatprep.subr.mxu0 0.0
    %798 = vmatpush1.msra.mxu0 0.0
    %799 = vmatprep.subr.mxu0 0.0
    %800 = vmatpush1.msra.mxu0 0.0
    %801 = vmatprep.mubr.f32.mxu0 0.0
    %802 = vmatmul.mubr.f32.gmra.mrb[0].mxu0 %v735
    %v803 = vpop.f32.mrb[0].mxu0
    %v804 = vadd.f32 0.0, %v803
    %v805 = vpop.f32.mrb[0].mxu0
    %806 = vdwg.mxu0
    %v807 = vld [vmem:[%s9] sm:$0x3]
    %v808 = vld [vmem:[%s7] sm:$0xff]
    %v809 = vld [vmem:[%s7 + $0x8] sm:$0xff]
    %v810 = vld [vmem:[%s7 + $0x10] sm:$0xff]
    %v811 = vld [vmem:[%s7 + $0x18] sm:$0xff]
    %v812 = vlaneseq
    %v813 = vshrl.u32 %v812, 7
    %v814 = vsub.s32 0, %v813
    %v815 = vrot.slane %v807, %v814
    %v817 = vsel %vm219, %v804, 0
    %819 = vmatprep.subr.mxu0 0.0
    %820 = vmatpush1.msra.mxu0 %v808
    %821 = vmatprep.subr.mxu0 0.0
    %822 = vmatpush1.msra.mxu0 %v809
    %823 = vmatprep.subr.mxu0 0.0
    %824 = vmatpush1.msra.mxu0 %v810
    %825 = vmatprep.subr.mxu0 0.0
    %826 = vmatpush1.msra.mxu0 %v811
    %827 = vmatprep.subr.mxu0 0.0
    %828 = vmatpush1.msra.mxu0 0.0
    %829 = vmatprep.subr.mxu0 0.0
    %830 = vmatpush1.msra.mxu0 0.0
    %831 = vmatprep.subr.mxu0 0.0
    %832 = vmatpush1.msra.mxu0 0.0
    %833 = vmatprep.subr.mxu0 0.0
    %834 = vmatpush1.msra.mxu0 0.0
    %835 = vmatprep.subr.mxu0 0.0
    %836 = vmatpush1.msra.mxu0 0.0
    %837 = vmatprep.subr.mxu0 0.0
    %838 = vmatpush1.msra.mxu0 0.0
    %839 = vmatprep.subr.mxu0 0.0
    %840 = vmatpush1.msra.mxu0 0.0
    %841 = vmatprep.subr.mxu0 0.0
    %842 = vmatpush1.msra.mxu0 0.0
    %843 = vmatprep.subr.mxu0 0.0
    %844 = vmatpush1.msra.mxu0 0.0
    %845 = vmatprep.subr.mxu0 0.0
    %846 = vmatpush1.msra.mxu0 0.0
    %847 = vmatprep.subr.mxu0 0.0
    %848 = vmatpush1.msra.mxu0 0.0
    %849 = vmatprep.subr.mxu0 0.0
    %850 = vmatpush1.msra.mxu0 0.0
    %851 = vmatprep.subr.mxu0 0.0
    %852 = vmatpush1.msra.mxu0 0.0
    %853 = vmatprep.subr.mxu0 0.0
    %854 = vmatpush1.msra.mxu0 0.0
    %855 = vmatprep.subr.mxu0 0.0
    %856 = vmatpush1.msra.mxu0 0.0
    %857 = vmatprep.subr.mxu0 0.0
    %858 = vmatpush1.msra.mxu0 0.0
    %859 = vmatprep.subr.mxu0 0.0
    %860 = vmatpush1.msra.mxu0 0.0
    %861 = vmatprep.subr.mxu0 0.0
    %862 = vmatpush1.msra.mxu0 0.0
    %863 = vmatprep.subr.mxu0 0.0
    %864 = vmatpush1.msra.mxu0 0.0
    %865 = vmatprep.subr.mxu0 0.0
    %866 = vmatpush1.msra.mxu0 0.0
    %867 = vmatprep.subr.mxu0 0.0
    %868 = vmatpush1.msra.mxu0 0.0
    %869 = vmatprep.subr.mxu0 0.0
    %870 = vmatpush1.msra.mxu0 0.0
    %871 = vmatprep.subr.mxu0 0.0
    %872 = vmatpush1.msra.mxu0 0.0
    %873 = vmatprep.subr.mxu0 0.0
    %874 = vmatpush1.msra.mxu0 0.0
    %875 = vmatprep.subr.mxu0 0.0
    %876 = vmatpush1.msra.mxu0 0.0
    %877 = vmatprep.subr.mxu0 0.0
    %878 = vmatpush1.msra.mxu0 0.0
    %879 = vmatprep.subr.mxu0 0.0
    %880 = vmatpush1.msra.mxu0 0.0
    %881 = vmatprep.subr.mxu0 0.0
    %882 = vmatpush1.msra.mxu0 0.0
    %883 = vmatprep.mubr.f32.mxu0 0.0
    %884 = vmatmul.mubr.f32.gmra.mrb[0].mxu0 %v817
    %v885 = vpop.f32.mrb[0].mxu0
    %v886 = vadd.f32 %v815, %v885
    %v887 = vpop.f32.mrb[0].mxu0
    %888 = vdwg.mxu0
    %v889 = vmax.f32 %v886, 0.0
    %v890 = vld [vmem:[#allocation8] sm:$0xff]
    %v891 = vld [vmem:[#allocation8 + $0x8] sm:$0xff]
    %v892 = vld [vmem:[#allocation8 + $0x10] sm:$0xff]
    %v893 = vld [vmem:[#allocation8 + $0x18] sm:$0xff]
    %v894 = vlaneseq
    %v895 = vshrl.u32 %v894, 7
    %v896 = vsub.s32 1, %v895
    %v897 = vrot.slane %v807, %v896
    %v899 = vsel %vm219, %v889, 0
    %901 = vmatprep.subr.mxu0 0.0
    %902 = vmatpush1.msra.mxu0 %v890
    %903 = vmatprep.subr.mxu0 0.0
    %904 = vmatpush1.msra.mxu0 %v891
    %905 = vmatprep.subr.mxu0 0.0
    %906 = vmatpush1.msra.mxu0 %v892
    %907 = vmatprep.subr.mxu0 0.0
    %908 = vmatpush1.msra.mxu0 %v893
    %909 = vmatprep.subr.mxu0 0.0
    %910 = vmatpush1.msra.mxu0 0.0
    %911 = vmatprep.subr.mxu0 0.0
    %912 = vmatpush1.msra.mxu0 0.0
    %913 = vmatprep.subr.mxu0 0.0
    %914 = vmatpush1.msra.mxu0 0.0
    %915 = vmatprep.subr.mxu0 0.0
    %916 = vmatpush1.msra.mxu0 0.0
    %917 = vmatprep.subr.mxu0 0.0
    %918 = vmatpush1.msra.mxu0 0.0
    %919 = vmatprep.subr.mxu0 0.0
    %920 = vmatpush1.msra.mxu0 0.0
    %921 = vmatprep.subr.mxu0 0.0
    %922 = vmatpush1.msra.mxu0 0.0
    %923 = vmatprep.subr.mxu0 0.0
    %924 = vmatpush1.msra.mxu0 0.0
    %925 = vmatprep.subr.mxu0 0.0
    %926 = vmatpush1.msra.mxu0 0.0
    %927 = vmatprep.subr.mxu0 0.0
    %928 = vmatpush1.msra.mxu0 0.0
    %929 = vmatprep.subr.mxu0 0.0
    %930 = vmatpush1.msra.mxu0 0.0
    %931 = vmatprep.subr.mxu0 0.0
    %932 = vmatpush1.msra.mxu0 0.0
    %933 = vmatprep.subr.mxu0 0.0
    %934 = vmatpush1.msra.mxu0 0.0
    %935 = vmatprep.subr.mxu0 0.0
    %936 = vmatpush1.msra.mxu0 0.0
    %937 = vmatprep.subr.mxu0 0.0
    %938 = vmatpush1.msra.mxu0 0.0
    %939 = vmatprep.subr.mxu0 0.0
    %940 = vmatpush1.msra.mxu0 0.0
    %941 = vmatprep.subr.mxu0 0.0
    %942 = vmatpush1.msra.mxu0 0.0
    %943 = vmatprep.subr.mxu0 0.0
    %944 = vmatpush1.msra.mxu0 0.0
    %945 = vmatprep.subr.mxu0 0.0
    %946 = vmatpush1.msra.mxu0 0.0
    %947 = vmatprep.subr.mxu0 0.0
    %948 = vmatpush1.msra.mxu0 0.0
    %949 = vmatprep.subr.mxu0 0.0
    %950 = vmatpush1.msra.mxu0 0.0
    %951 = vmatprep.subr.mxu0 0.0
    %952 = vmatpush1.msra.mxu0 0.0
    %953 = vmatprep.subr.mxu0 0.0
    %954 = vmatpush1.msra.mxu0 0.0
    %955 = vmatprep.subr.mxu0 0.0
    %956 = vmatpush1.msra.mxu0 0.0
    %957 = vmatprep.subr.mxu0 0.0
    %958 = vmatpush1.msra.mxu0 0.0
    %959 = vmatprep.subr.mxu0 0.0
    %960 = vmatpush1.msra.mxu0 0.0
    %961 = vmatprep.subr.mxu0 0.0
    %962 = vmatpush1.msra.mxu0 0.0
    %963 = vmatprep.subr.mxu0 0.0
    %964 = vmatpush1.msra.mxu0 0.0
    %965 = vmatprep.mubr.f32.mxu0 0.0
    %966 = vmatmul.mubr.f32.gmra.mrb[0].mxu0 %v899
    %v967 = vpop.f32.mrb[0].mxu0
    %v968 = vadd.f32 %v897, %v967
    %v969 = vpop.f32.mrb[0].mxu0
    %970 = vdwg.mxu0
    %v971 = vxor.u32 %v968, 2147483648
    %v972 = vmul.f32 %v971, 1.442695
    %v973 = vpow.pop %v972
    %v974 = vadd.f32 %v973, 1.0
    %v975 = vrcp.pop %v974
    %v976 = vmul.f32 1.0, %v975
    %v977 = vmul.f32 %v976, 0.9
    %v978 = vadd.f32 %v977, 0.1
    %v979 = vsel %vm541, %v968, %v978
    %980 = vst.msk [vmem:[#allocation12] sm:$0x3] %vm551, %v979
    %v981 = vld [vmem:[%s12] sm:$0x3]
    %v982 = vld [vmem:[%s10] sm:$0x7]
    %v983 = vlaneseq
    %v984 = vshrl.u32 %v983, 7
    %v985 = vsub.s32 0, %v984
    %v986 = vrot.slane %v981, %v985
    %v988 = vsel %vm130, %v982, 0
    %990 = vmatprep.subr.mxu0 0.0
    %991 = vmatpush1.msra.mxu0 %v988
    %992 = vmatprep.subr.mxu0 0.0
    %993 = vmatpush1.msra.mxu0 0.0
    %994 = vmatprep.subr.mxu0 0.0
    %995 = vmatpush1.msra.mxu0 0.0
    %996 = vmatprep.subr.mxu0 0.0
    %997 = vmatpush1.msra.mxu0 0.0
    %998 = vmatprep.subr.mxu0 0.0
    %999 = vmatpush1.msra.mxu0 0.0
    %1000 = vmatprep.subr.mxu0 0.0
    %1001 = vmatpush1.msra.mxu0 0.0
    %1002 = vmatprep.subr.mxu0 0.0
    %1003 = vmatpush1.msra.mxu0 0.0
    %1004 = vmatprep.subr.mxu0 0.0
    %1005 = vmatpush1.msra.mxu0 0.0
    %1006 = vmatprep.subr.mxu0 0.0
    %1007 = vmatpush1.msra.mxu0 0.0
    %1008 = vmatprep.subr.mxu0 0.0
    %1009 = vmatpush1.msra.mxu0 0.0
    %1010 = vmatprep.subr.mxu0 0.0
    %1011 = vmatpush1.msra.mxu0 0.0
    %1012 = vmatprep.subr.mxu0 0.0
    %1013 = vmatpush1.msra.mxu0 0.0
    %1014 = vmatprep.subr.mxu0 0.0
    %1015 = vmatpush1.msra.mxu0 0.0
    %1016 = vmatprep.subr.mxu0 0.0
    %1017 = vmatpush1.msra.mxu0 0.0
    %1018 = vmatprep.subr.mxu0 0.0
    %1019 = vmatpush1.msra.mxu0 0.0
    %1020 = vmatprep.subr.mxu0 0.0
    %1021 = vmatpush1.msra.mxu0 0.0
    %1022 = vmatprep.subr.mxu0 0.0
    %1023 = vmatpush1.msra.mxu0 0.0
    %1024 = vmatprep.subr.mxu0 0.0
    %1025 = vmatpush1.msra.mxu0 0.0
    %1026 = vmatprep.subr.mxu0 0.0
    %1027 = vmatpush1.msra.mxu0 0.0
    %1028 = vmatprep.subr.mxu0 0.0
    %1029 = vmatpush1.msra.mxu0 0.0
    %1030 = vmatprep.subr.mxu0 0.0
    %1031 = vmatpush1.msra.mxu0 0.0
    %1032 = vmatprep.subr.mxu0 0.0
    %1033 = vmatpush1.msra.mxu0 0.0
    %1034 = vmatprep.subr.mxu0 0.0
    %1035 = vmatpush1.msra.mxu0 0.0
    %1036 = vmatprep.subr.mxu0 0.0
    %1037 = vmatpush1.msra.mxu0 0.0
    %1038 = vmatprep.subr.mxu0 0.0
    %1039 = vmatpush1.msra.mxu0 0.0
    %1040 = vmatprep.subr.mxu0 0.0
    %1041 = vmatpush1.msra.mxu0 0.0
    %1042 = vmatprep.subr.mxu0 0.0
    %1043 = vmatpush1.msra.mxu0 0.0
    %1044 = vmatprep.subr.mxu0 0.0
    %1045 = vmatpush1.msra.mxu0 0.0
    %1046 = vmatprep.subr.mxu0 0.0
    %1047 = vmatpush1.msra.mxu0 0.0
    %1048 = vmatprep.subr.mxu0 0.0
    %1049 = vmatpush1.msra.mxu0 0.0
    %1050 = vmatprep.subr.mxu0 0.0
    %1051 = vmatpush1.msra.mxu0 0.0
    %1052 = vmatprep.subr.mxu0 0.0
    %1053 = vmatpush1.msra.mxu0 0.0
    %1054 = vmatprep.mubr.f32.mxu0 0.0
    %1055 = vmatmul.mubr.f32.gmra.mrb[0].mxu0 %v125
    %v1056 = vpop.f32.mrb[0].mxu0
    %v1057 = vadd.f32 %v986, %v1056
    %v1058 = vpop.f32.mrb[0].mxu0
    %1059 = vmatprep.mubr.f32.mxu0 0.0
    %1060 = vmatmul.mubr.f32.gmra.mrb[0].mxu0 %v128
    %v1061 = vpop.f32.mrb[0].mxu0
    %v1062 = vadd.f32 %v986, %v1061
    %v1063 = vpop.f32.mrb[0].mxu0
    %1064 = vdwg.mxu0
    %v1065 = vmax.f32 %v1057, 0.0
    %v1066 = vmax.f32 %v1062, 0.0
    %v1067 = vld [vmem:[#allocation10] sm:$0xff]
    %v1068 = vld [vmem:[#allocation10 + $0x8] sm:$0xff]
    %v1069 = vld [vmem:[#allocation10 + $0x10] sm:$0xff]
    %v1070 = vld [vmem:[#allocation10 + $0x18] sm:$0xff]
    %v1071 = vlaneseq
    %v1072 = vshrl.u32 %v1071, 7
    %v1073 = vsub.s32 1, %v1072
    %v1074 = vrot.slane %v981, %v1073
    %v1076 = vsel %vm219, %v1065, 0
    %v1079 = vsel %vm219, %v1066, 0
    %1081 = vmatprep.subr.mxu0 0.0
    %1082 = vmatpush1.msra.mxu0 %v1067
    %1083 = vmatprep.subr.mxu0 0.0
    %1084 = vmatpush1.msra.mxu0 %v1068
    %1085 = vmatprep.subr.mxu0 0.0
    %1086 = vmatpush1.msra.mxu0 %v1069
    %1087 = vmatprep.subr.mxu0 0.0
    %1088 = vmatpush1.msra.mxu0 %v1070
    %1089 = vmatprep.subr.mxu0 0.0
    %1090 = vmatpush1.msra.mxu0 0.0
    %1091 = vmatprep.subr.mxu0 0.0
    %1092 = vmatpush1.msra.mxu0 0.0
    %1093 = vmatprep.subr.mxu0 0.0
    %1094 = vmatpush1.msra.mxu0 0.0
    %1095 = vmatprep.subr.mxu0 0.0
    %1096 = vmatpush1.msra.mxu0 0.0
    %1097 = vmatprep.subr.mxu0 0.0
    %1098 = vmatpush1.msra.mxu0 0.0
    %1099 = vmatprep.subr.mxu0 0.0
    %1100 = vmatpush1.msra.mxu0 0.0
    %1101 = vmatprep.subr.mxu0 0.0
    %1102 = vmatpush1.msra.mxu0 0.0
    %1103 = vmatprep.subr.mxu0 0.0
    %1104 = vmatpush1.msra.mxu0 0.0
    %1105 = vmatprep.subr.mxu0 0.0
    %1106 = vmatpush1.msra.mxu0 0.0
    %1107 = vmatprep.subr.mxu0 0.0
    %1108 = vmatpush1.msra.mxu0 0.0
    %1109 = vmatprep.subr.mxu0 0.0
    %1110 = vmatpush1.msra.mxu0 0.0
    %1111 = vmatprep.subr.mxu0 0.0
    %1112 = vmatpush1.msra.mxu0 0.0
    %1113 = vmatprep.subr.mxu0 0.0
    %1114 = vmatpush1.msra.mxu0 0.0
    %1115 = vmatprep.subr.mxu0 0.0
    %1116 = vmatpush1.msra.mxu0 0.0
    %1117 = vmatprep.subr.mxu0 0.0
    %1118 = vmatpush1.msra.mxu0 0.0
    %1119 = vmatprep.subr.mxu0 0.0
    %1120 = vmatpush1.msra.mxu0 0.0
    %1121 = vmatprep.subr.mxu0 0.0
    %1122 = vmatpush1.msra.mxu0 0.0
    %1123 = vmatprep.subr.mxu0 0.0
    %1124 = vmatpush1.msra.mxu0 0.0
    %1125 = vmatprep.subr.mxu0 0.0
    %1126 = vmatpush1.msra.mxu0 0.0
    %1127 = vmatprep.subr.mxu0 0.0
    %1128 = vmatpush1.msra.mxu0 0.0
    %1129 = vmatprep.subr.mxu0 0.0
    %1130 = vmatpush1.msra.mxu0 0.0
    %1131 = vmatprep.subr.mxu0 0.0
    %1132 = vmatpush1.msra.mxu0 0.0
    %1133 = vmatprep.subr.mxu0 0.0
    %1134 = vmatpush1.msra.mxu0 0.0
    %1135 = vmatprep.subr.mxu0 0.0
    %1136 = vmatpush1.msra.mxu0 0.0
    %1137 = vmatprep.subr.mxu0 0.0
    %1138 = vmatpush1.msra.mxu0 0.0
    %1139 = vmatprep.subr.mxu0 0.0
    %1140 = vmatpush1.msra.mxu0 0.0
    %1141 = vmatprep.subr.mxu0 0.0
    %1142 = vmatpush1.msra.mxu0 0.0
    %1143 = vmatprep.subr.mxu0 0.0
    %1144 = vmatpush1.msra.mxu0 0.0
    %1145 = vmatprep.mubr.f32.mxu0 0.0
    %1146 = vmatmul.mubr.f32.gmra.mrb[0].mxu0 %v1076
    %v1147 = vpop.f32.mrb[0].mxu0
    %v1148 = vadd.f32 %v1074, %v1147
    %v1149 = vpop.f32.mrb[0].mxu0
    %1150 = vmatprep.mubr.f32.mxu0 0.0
    %1151 = vmatmul.mubr.f32.gmra.mrb[0].mxu0 %v1079
    %v1152 = vpop.f32.mrb[0].mxu0
    %v1153 = vadd.f32 %v1074, %v1152
    %v1154 = vpop.f32.mrb[0].mxu0
    %1155 = vdwg.mxu0
    %1156 = vmatprep.subr.mxu0 0.0
    %1157 = vmatpush1.msra.mxu0 %v1148
    %1158 = vmatprep.subr.mxu0 0.0
    %1159 = vmatpush1.msra.mxu0 %v1153
    %1160 = vmatprep.subr.mxu0 0.0
    %1161 = vmatpush1.msra.mxu0 0.0
    %1162 = vmatprep.subr.mxu0 0.0
    %1163 = vmatpush1.msra.mxu0 0.0
    %1164 = vmatprep.subr.mxu0 0.0
    %1165 = vmatpush1.msra.mxu0 0.0
    %1166 = vmatprep.subr.mxu0 0.0
    %1167 = vmatpush1.msra.mxu0 0.0
    %1168 = vmatprep.subr.mxu0 0.0
    %1169 = vmatpush1.msra.mxu0 0.0
    %1170 = vmatprep.subr.mxu0 0.0
    %1171 = vmatpush1.msra.mxu0 0.0
    %1172 = vmatprep.subr.mxu0 0.0
    %1173 = vmatpush1.msra.mxu0 0.0
    %1174 = vmatprep.subr.mxu0 0.0
    %1175 = vmatpush1.msra.mxu0 0.0
    %1176 = vmatprep.subr.mxu0 0.0
    %1177 = vmatpush1.msra.mxu0 0.0
    %1178 = vmatprep.subr.mxu0 0.0
    %1179 = vmatpush1.msra.mxu0 0.0
    %1180 = vmatprep.subr.mxu0 0.0
    %1181 = vmatpush1.msra.mxu0 0.0
    %1182 = vmatprep.subr.mxu0 0.0
    %1183 = vmatpush1.msra.mxu0 0.0
    %1184 = vmatprep.subr.mxu0 0.0
    %1185 = vmatpush1.msra.mxu0 0.0
    %1186 = vmatprep.subr.mxu0 0.0
    %1187 = vmatpush1.msra.mxu0 0.0
    %1188 = vmatprep.subr.mxu0 0.0
    %1189 = vmatpush1.msra.mxu0 0.0
    %1190 = vmatprep.subr.mxu0 0.0
    %1191 = vmatpush1.msra.mxu0 0.0
    %1192 = vmatprep.subr.mxu0 0.0
    %1193 = vmatpush1.msra.mxu0 0.0
    %1194 = vmatprep.subr.mxu0 0.0
    %1195 = vmatpush1.msra.mxu0 0.0
    %1196 = vmatprep.subr.mxu0 0.0
    %1197 = vmatpush1.msra.mxu0 0.0
    %1198 = vmatprep.subr.mxu0 0.0
    %1199 = vmatpush1.msra.mxu0 0.0
    %1200 = vmatprep.subr.mxu0 0.0
    %1201 = vmatpush1.msra.mxu0 0.0
    %1202 = vmatprep.subr.mxu0 0.0
    %1203 = vmatpush1.msra.mxu0 0.0
    %1204 = vmatprep.subr.mxu0 0.0
    %1205 = vmatpush1.msra.mxu0 0.0
    %1206 = vmatprep.subr.mxu0 0.0
    %1207 = vmatpush1.msra.mxu0 0.0
    %1208 = vmatprep.subr.mxu0 0.0
    %1209 = vmatpush1.msra.mxu0 0.0
    %1210 = vmatprep.subr.mxu0 0.0
    %1211 = vmatpush1.msra.mxu0 0.0
    %1212 = vmatprep.subr.mxu0 0.0
    %1213 = vmatpush1.msra.mxu0 0.0
    %1214 = vmatprep.subr.mxu0 0.0
    %1215 = vmatpush1.msra.mxu0 0.0
    %1216 = vmatprep.subr.mxu0 0.0
    %1217 = vmatpush1.msra.mxu0 0.0
    %1218 = vmatprep.subr.mxu0 0.0
    %1219 = vmatpush1.msra.mxu0 0.0
    %1220 = vmatprep.mubr.f32.mxu0 0.0
    %1221 = vmatmul.mubr.f32.gmra.mrb[0].mxu0 %v303
    %v1222 = vpop.f32.mrb[0].mxu0
    %v1223 = vadd.f32 0.0, %v1222
    %v1224 = vpop.f32.mrb[0].mxu0
    %1225 = vdwg.mxu0
    %1226 = vst.msk [vmem:[#allocation14] sm:$0x3] %vm551, %v1223
    // Predicated region
    $region74: #{tpu_custom_call.1} parent=1 // pred_check
      _
    $region75: #{tpu_custom_call.1} parent=1 // pred_check_branch
      %1228 = sbr.rel (0) target = $region77
    $region76: #{tpu_custom_call.1} parent=1 // pred_region
      %s1230 = ssub.s32 32, 32
      %1231 = vsyncadd [#allocation4], %s1230
      %s1233 = sshll.u32 [#allocation11], 4
      %s1234 = int_to_ptr.vmem [resolvable:$true] %s1233
      %1236 = dma.vmem_to_hbm [thread:$0]  %s1234, 32, %s13, [#allocation4]
    $region77: #{tpu_custom_call.1} parent=1 // pred_fallthru
      _
    // Predicated region
    $region78: #{tpu_custom_call.1} parent=1 // pred_check
      _
    $region79: #{tpu_custom_call.1} parent=1 // pred_check_branch
      %1238 = sbr.rel (0) target = $region81
    $region80: #{tpu_custom_call.1} parent=1 // pred_region
      %s1240 = ssub.s32 32, 32
      %1241 = vsyncadd [#allocation13], %s1240
      %s1243 = sshll.u32 [#allocation12], 4
      %s1244 = int_to_ptr.vmem [resolvable:$true] %s1243
      %1246 = dma.vmem_to_hbm [thread:$0]  %s1244, 32, %s14, [#allocation13]
    $region81: #{tpu_custom_call.1} parent=1 // pred_fallthru
      _
    // Predicated region
    $region82: #{tpu_custom_call.1} parent=1 // pred_check
      _
    $region83: #{tpu_custom_call.1} parent=1 // pred_check_branch
      %1248 = sbr.rel (0) target = $region85
    $region84: #{tpu_custom_call.1} parent=1 // pred_region
      %s1250 = ssub.s32 32, 32
      %1251 = vsyncadd [#allocation13], %s1250
      %s1253 = sshll.u32 [#allocation14], 4
      %s1254 = int_to_ptr.vmem [resolvable:$true] %s1253
      %1256 = dma.vmem_to_hbm [thread:$0]  %s1254, 32, %s15, [#allocation13]
    $region85: #{tpu_custom_call.1} parent=1 // pred_fallthru
      _
    // Predicated region
    $region86: #{tpu_custom_call.1} parent=1 // pred_check
      _
    $region87: #{tpu_custom_call.1} parent=1 // pred_check_branch
      %1258 = sbr.rel (0) target = $region89
    $region88: #{tpu_custom_call.1} parent=1 // pred_region
      %1259 = dma.done [#allocation4], 32
    $region89: #{tpu_custom_call.1} parent=1 // pred_fallthru
      _
    // Predicated region
    $region90: #{tpu_custom_call.1} parent=1 // pred_check
      _
    $region91: #{tpu_custom_call.1} parent=1 // pred_check_branch
      %1261 = sbr.rel (0) target = $region93
    $region92: #{tpu_custom_call.1} parent=1 // pred_region
      %1262 = dma.done [#allocation13], 32
    $region93: #{tpu_custom_call.1} parent=1 // pred_fallthru
      _
    // Predicated region
    $region94: #{tpu_custom_call.1} parent=1 // pred_check
      _
    $region95: #{tpu_custom_call.1} parent=1 // pred_check_branch
      %1264 = sbr.rel (0) target = $region97
    $region96: #{tpu_custom_call.1} parent=1 // pred_region
      %1265 = dma.done [#allocation13], 32
    $region97: #{tpu_custom_call.1} parent=1 // pred_fallthru
      _
    %1266 = vsyncpa [#allocation3], 1
    %1267 = vsyncpa [#allocation6], 1
    %1268 = vsyncpa [#allocation9], 1
    %1269 = vsyncpa [#allocation4], 1
    %1270 = vsyncpa [#allocation13], 1

</llo_original>
